<compile_context>
chip_gen: v6e
topology: v6e:2x2x1
jax: 0.10.0
libtpu: 0.0.40
codegen_flags: <defaults>
</compile_context>

<pallas_src>
import functools

import jax
import jax.numpy as jnp
from jax.experimental import pallas as pl
from jax.experimental.pallas import tpu as pltpu

# --- small, module-consistent synthetic config ------------------------------
B, S, H = 2, 8, 64              # batch, seq, hidden
NH = 4                          # attention heads
NKV = 4                         # kv heads (Phi-3-mini: nkv == nh)
HD = H // NH                    # head dim = 16
I = 128                         # MLP intermediate size
OP = NH * HD + 2 * NKV * HD     # fused qkv out dim = 192
EPS = 1e-5
ROPE_THETA = 10000.0
NEG_INF = -1e30


def phi3_layer_kernel(hs_ref, cos_ref, sin_ref, rot_ref, bias_ref,
                      w_inln_ref, w_qkv_ref, w_o_ref,
                      w_postln_ref, w_gu_ref, w_down_ref,
                      out_ref, *, nh, nkv, hd, inter, eps):
    f32, bf16 = jnp.float32, jnp.bfloat16
    x = hs_ref[...]                                   # (R, H) f32, R = B*S
    r, hdim = x.shape
    g = nh + 2 * nkv

    # ---- input RMSNorm (f32 on the VPU) ----
    var = jnp.mean(x * x, axis=-1, keepdims=True)
    xn = x * jax.lax.rsqrt(var + eps) * w_inln_ref[...]

    # ---- QKV projection as one batched-over-heads MXU contraction ----
    # Head-major weights (g, H, hd) -> head-major output (g, R, hd); no
    # in-kernel lane slicing or transposes needed downstream.
    xb = jnp.broadcast_to(xn.astype(bf16), (g, r, hdim))
    qkv_h = jnp.einsum('grh,ghd->grd', xb, w_qkv_ref[...],
                       preferred_element_type=f32)    # (g, R, hd) f32

    # ---- RoPE on all q & k heads at once ----
    # rotate_half == x @ rot  (exact +-1 selector matrix, runs on the MXU
    # instead of per-head lane concatenates).
    nqk = nh + nkv
    qk = qkv_h[:nqk]                                  # (nh+nkv, R, hd)
    qk_rot_half = jnp.dot(qk.reshape(nqk * r, hd), rot_ref[...],
                          preferred_element_type=f32).reshape(nqk, r, hd)
    qk = qk * cos_ref[...][None] + qk_rot_half * sin_ref[...][None]
    q_h = qk[:nh]
    k_h = qk[nh:]
    v_h = qkv_h[nqk:]
    if nh != nkv:                                     # GQA: repeat kv heads
        k_h = jnp.repeat(k_h, nh // nkv, axis=0)
        v_h = jnp.repeat(v_h, nh // nkv, axis=0)

    # ---- attention: single batched einsum stream over heads ----
    # All batches handled jointly via the precomputed block-diagonal causal
    # bias over the flattened (B*S) rows.
    scale = 1.0 / (hd ** 0.5)
    scores = jnp.einsum('hqd,hkd->hqk', q_h.astype(bf16), k_h.astype(bf16),
                        preferred_element_type=f32)
    scores = scores * scale + bias_ref[...][None]
    m = jnp.max(scores, axis=-1, keepdims=True)
    p = jnp.exp(scores - m)
    p = p * pl.reciprocal(jnp.sum(p, axis=-1, keepdims=True), approx=True)
    attn = jnp.einsum('hqk,hkd->hqd', p.astype(bf16), v_h.astype(bf16),
                      preferred_element_type=f32)     # (nh, R, hd)

    # ---- o_proj: head concat folded into batched matmul + major-axis sum ---
    attn_out = jnp.sum(
        jnp.einsum('hqd,hdk->hqk', attn.astype(bf16), w_o_ref[...],
                   preferred_element_type=f32), axis=0)           # (R, H)

    h1 = x + attn_out                                 # residual 1

    # ---- post-attention RMSNorm ----
    var2 = jnp.mean(h1 * h1, axis=-1, keepdims=True)
    hn = h1 * jax.lax.rsqrt(var2 + eps) * w_postln_ref[...]

    # ---- MLP: gate_up -> up * SiLU(gate) -> down ----
    gu = jnp.dot(hn.astype(bf16), w_gu_ref[...], preferred_element_type=f32)
    gate = gu[:, :inter]                              # 128-lane aligned slices
    up = gu[:, inter:]
    act = up * (gate * jax.nn.sigmoid(gate))
    mlp = jnp.dot(act.astype(bf16), w_down_ref[...], preferred_element_type=f32)

    out_ref[...] = h1 + mlp                           # residual 2
    # Note: out last-dim is H=64 (<128 lanes) -> masked store; accepted at this
    # toy size (output is a single vreg's worth of data).


@jax.jit
def phi3_decoder_layer(hidden_states, params, cos, sin):
    bx, sx, hx = hidden_states.shape
    r = bx * sx
    g = NH + 2 * NKV

    # Host/XLA-side layout plumbing, hoisted out of the kernel.
    hs2d = hidden_states.reshape(r, hx)
    cos_r = jnp.tile(cos, (bx, 1)).astype(jnp.float32)           # (R, HD)
    sin_r = jnp.tile(sin, (bx, 1)).astype(jnp.float32)
    # rotate_half as an exact +-1 selector matrix: x @ rot == [-x2, x1]
    ii = jnp.arange(HD)[:, None]
    jj = jnp.arange(HD)[None, :]
    rot = (jnp.where(jj == ii + HD // 2, 1.0, 0.0)
           + jnp.where(jj == ii - HD // 2, -1.0, 0.0)).astype(jnp.float32)
    # block-diagonal causal additive bias over flattened (B*S) rows
    row = jnp.arange(r)[:, None]
    col = jnp.arange(r)[None, :]
    allowed = (row // sx == col // sx) & (col <= row)
    bias = jnp.where(allowed, 0.0, NEG_INF).astype(jnp.float32)
    # head-major bf16 weights (MXU operands); accumulation stays f32 in-kernel
    w_qkv3 = params["w_qkv"].reshape(hx, g, HD).transpose(1, 0, 2).astype(jnp.bfloat16)
    w_o3 = params["w_o"].reshape(NH, HD, hx).astype(jnp.bfloat16)
    w_gu = params["w_gu"].astype(jnp.bfloat16)
    w_down = params["w_down"].astype(jnp.bfloat16)
    w_inln = params["input_ln"].astype(jnp.float32)
    w_postln = params["post_ln"].astype(jnp.float32)

    operands = (hs2d, cos_r, sin_r, rot, bias,
                w_inln, w_qkv3, w_o3, w_postln, w_gu, w_down)

    flops = (2 * r * hx * OP                       # qkv projection
             + 2 * (NH + NKV) * r * HD * HD        # rope rotation matmul
             + 2 * NH * r * r * HD * 2             # scores + p@v
             + 2 * NH * r * HD * hx                # o_proj
             + 2 * r * hx * 2 * I                  # gate_up
             + 2 * r * I * hx)                     # down
    transcendentals = NH * r * r + r * I + 2 * r + NH * r
    bytes_accessed = (sum(int(o.size) * o.dtype.itemsize for o in operands)
                      + r * hx * 4)

    kernel = functools.partial(phi3_layer_kernel,
                               nh=NH, nkv=NKV, hd=HD, inter=I, eps=EPS)
    vmem = pl.BlockSpec(memory_space=pltpu.MemorySpace.VMEM)
    # Single program, no grid: the whole working set fits VMEM trivially, so a
    # grid over B would only add per-step overhead.
    # TODO(synk): at production Phi-3 sizes (H=3072, I=8192) re-tile with a
    # K-reduction grid axis, pl.Buffered(1) weight specs and an explicit
    # vmem_limit_bytes so the weights fit v7x's 64 MiB VMEM.
    out2d = pl.pallas_call(
        kernel,
        out_shape=jax.ShapeDtypeStruct((r, hx), jnp.float32),
        in_specs=[vmem] * len(operands),
        out_specs=vmem,
        cost_estimate=pl.CostEstimate(flops=flops,
                                      transcendentals=transcendentals,
                                      bytes_accessed=bytes_accessed),
    )(*operands)
    return out2d.reshape(bx, sx, hx)


def phi3_skippable_layer(hidden_states, params, cos, sin,
                         active_layer_list, layer_id,
                         past_key_value=None, output_attentions=False,
                         use_cache=False):
    """Mirrors Phi3SkippableLayer.forward (Python-level skip decision)."""
    is_active = active_layer_list[layer_id]
    if is_active:
        out = phi3_decoder_layer(hidden_states, params, cos, sin)
        outputs = (out,)
        if output_attentions:
            outputs += (None,)  # TODO(synk): attention weights not exported from fused kernel
        if use_cache:
            outputs += (None,)  # TODO(synk): kv-cache export not implemented in fused kernel
        return outputs
    else:
        outputs = (hidden_states,)
        if output_attentions:
            outputs += (None,)
        if use_cache:
            outputs += (past_key_value,)
        return outputs


# --- plain-JAX f32 reference for verification --------------------------------
def ref_layer(x, params, cos, sin):
    def rmsnorm(t, w):
        v = jnp.mean(t * t, axis=-1, keepdims=True)
        return t * jax.lax.rsqrt(v + EPS) * w

    xn = rmsnorm(x, params["input_ln"][0])
    qkv = xn @ params["w_qkv"]
    q = qkv[..., : NH * HD]
    k = qkv[..., NH * HD: NH * HD + NKV * HD]
    v = qkv[..., NH * HD + NKV * HD:]

    def heads(t, n):
        return t.reshape(B, S, n, HD).transpose(0, 2, 1, 3)

    q, k, v = heads(q, NH), heads(k, NKV), heads(v, NKV)

    def rot(t):
        return jnp.concatenate([-t[..., HD // 2:], t[..., : HD // 2]], axis=-1)

    q = q * cos + rot(q) * sin
    k = k * cos + rot(k) * sin
    scores = jnp.einsum("bhqd,bhkd->bhqk", q, k) / (HD ** 0.5)
    mask = jnp.tril(jnp.ones((S, S), bool))
    scores = jnp.where(mask, scores, NEG_INF)
    p = jax.nn.softmax(scores, axis=-1)
    attn = jnp.einsum("bhqk,bhkd->bhqd", p, v).transpose(0, 2, 1, 3).reshape(B, S, NH * HD)
    attn = attn @ params["w_o"]
    h1 = x + attn
    hn = rmsnorm(h1, params["post_ln"][0])
    gu = hn @ params["w_gu"]
    gate, up = gu[..., :I], gu[..., I:]
    mlp = (up * gate * jax.nn.sigmoid(gate)) @ params["w_down"]
    return h1 + mlp


if __name__ == "__main__":
    key = jax.random.PRNGKey(0)
    ks = jax.random.split(key, 7)
    hidden_states = jax.random.normal(ks[0], (B, S, H), jnp.float32)

    params = {
        "input_ln": jnp.ones((1, H), jnp.float32)
                    + 0.01 * jax.random.normal(ks[1], (1, H), jnp.float32),
        "w_qkv": 0.05 * jax.random.normal(ks[2], (H, OP), jnp.float32),
        "w_o": 0.05 * jax.random.normal(ks[3], (NH * HD, H), jnp.float32),
        "post_ln": jnp.ones((1, H), jnp.float32)
                   + 0.01 * jax.random.normal(ks[4], (1, H), jnp.float32),
        "w_gu": 0.05 * jax.random.normal(ks[5], (H, 2 * I), jnp.float32),
        "w_down": 0.05 * jax.random.normal(ks[6], (I, H), jnp.float32),
    }

    # RoPE tables (deterministic glue)
    pos = jnp.arange(S, dtype=jnp.float32)
    inv_freq = 1.0 / (ROPE_THETA ** (jnp.arange(0, HD, 2, dtype=jnp.float32) / HD))
    freqs = pos[:, None] * inv_freq[None, :]
    emb = jnp.concatenate([freqs, freqs], axis=-1)
    cos, sin = jnp.cos(emb), jnp.sin(emb)

    active_layer_list = [True, False]

    out_active = phi3_skippable_layer(hidden_states, params, cos, sin,
                                      active_layer_list, layer_id=0)
    out_skip = phi3_skippable_layer(hidden_states, params, cos, sin,
                                    active_layer_list, layer_id=1)
    jax.block_until_ready(out_active[0])
    jax.block_until_ready(out_skip[0])

    ref = ref_layer(hidden_states, params, cos, sin)
    # Kernel feeds bf16 operands to the MXU (f32 accumulate) and uses an
    # approximate EUP reciprocal in softmax, so compare against the pure-f32
    # reference with a correspondingly looser tolerance.
    max_err = float(jnp.max(jnp.abs(out_active[0] - ref)))
    assert jnp.allclose(out_active[0], ref, atol=5e-2, rtol=5e-2), \
        f"active path mismatch (max abs err = {max_err})"
    assert jnp.allclose(out_skip[0], hidden_states), "skip path must be identity"

    print("KERNEL_OK")
</pallas_src>

<mosaic_0001>
module attributes {stable_mosaic.version = 11 : i64} {
  func.func @phi3_layer_kernel(%arg0: memref<16x64xf32, #tpu.memory_space<vmem>>, %arg1: memref<16x16xf32, #tpu.memory_space<vmem>>, %arg2: memref<16x16xf32, #tpu.memory_space<vmem>>, %arg3: memref<16x16xf32, #tpu.memory_space<vmem>>, %arg4: memref<16x16xf32, #tpu.memory_space<vmem>>, %arg5: memref<1x64xf32, #tpu.memory_space<vmem>>, %arg6: memref<12x64x16xbf16, #tpu.memory_space<vmem>>, %arg7: memref<4x16x64xbf16, #tpu.memory_space<vmem>>, %arg8: memref<1x64xf32, #tpu.memory_space<vmem>>, %arg9: memref<64x256xbf16, #tpu.memory_space<vmem>>, %arg10: memref<128x64xbf16, #tpu.memory_space<vmem>>, %arg11: memref<16x64xf32, #tpu.memory_space<vmem>>) attributes {dimension_semantics = [], scalar_prefetch = 0 : i64, scratch_operands = 0 : i64, tpu.core_type = #tpu.core_type<tc>} {
    %c0 = arith.constant 0 : index
    %c0_0 = arith.constant 0 : index
    %0 = vector.load %arg0[%c0, %c0_0] : memref<16x64xf32, #tpu.memory_space<vmem>>, vector<16x64xf32>
    %1 = arith.mulf %0, %0 : vector<16x64xf32>
    %cst = arith.constant dense<0.000000e+00> : vector<16xf32>
    %2 = vector.multi_reduction <add>, %1, %cst [1] : vector<16x64xf32> to vector<16xf32>
    %3 = vector.shape_cast %2 : vector<16xf32> to vector<16x1xf32>
    %cst_1 = arith.constant 6.400000e+01 : f32
    %4 = vector.broadcast %cst_1 : f32 to vector<16x1xf32>
    %5 = arith.divf %3, %4 : vector<16x1xf32>
    %cst_2 = arith.constant 9.99999974E-6 : f32
    %6 = vector.broadcast %cst_2 : f32 to vector<16x1xf32>
    %7 = arith.addf %5, %6 : vector<16x1xf32>
    %8 = math.rsqrt %7 : vector<16x1xf32>
    %9 = vector.broadcast %8 : vector<16x1xf32> to vector<16x64xf32>
    %10 = arith.mulf %0, %9 : vector<16x64xf32>
    %c0_3 = arith.constant 0 : index
    %c0_4 = arith.constant 0 : index
    %11 = vector.load %arg5[%c0_3, %c0_4] : memref<1x64xf32, #tpu.memory_space<vmem>>, vector<1x64xf32>
    %12 = vector.broadcast %11 : vector<1x64xf32> to vector<16x64xf32>
    %13 = arith.mulf %10, %12 : vector<16x64xf32>
    %14 = arith.truncf %13 : vector<16x64xf32> to vector<16x64xbf16>
    %15 = vector.shape_cast %14 : vector<16x64xbf16> to vector<1x16x64xbf16>
    %16 = vector.broadcast %15 : vector<1x16x64xbf16> to vector<12x16x64xbf16>
    %c0_5 = arith.constant 0 : index
    %c0_6 = arith.constant 0 : index
    %c0_7 = arith.constant 0 : index
    %17 = vector.load %arg6[%c0_5, %c0_6, %c0_7] : memref<12x64x16xbf16, #tpu.memory_space<vmem>>, vector<12x64x16xbf16>
    "tpu.trace_start"() <{level = 10 : i32, message = "grh,ghd->grd"}> : () -> ()
    %cst_8 = arith.constant dense<0.000000e+00> : vector<12x16x16xf32>
    %18 = tpu.matmul %16, %17, %cst_8 {dimension_numbers = #tpu.dot_dimension_numbers<[2], [1], [1], [2], [0, 0, 0, 1, 1, 2], [0], [0]>} : vector<12x16x64xbf16>, vector<12x64x16xbf16>, vector<12x16x16xf32> -> vector<12x16x16xf32>
    "tpu.trace_stop"() : () -> ()
    %19 = vector.extract_strided_slice %18 {offsets = [0, 0, 0], sizes = [8, 16, 16], strides = [1, 1, 1]} : vector<12x16x16xf32> to vector<8x16x16xf32>
    %20 = vector.shape_cast %19 : vector<8x16x16xf32> to vector<128x16xf32>
    %c0_9 = arith.constant 0 : index
    %c0_10 = arith.constant 0 : index
    %21 = vector.load %arg3[%c0_9, %c0_10] : memref<16x16xf32, #tpu.memory_space<vmem>>, vector<16x16xf32>
    %cst_11 = arith.constant dense<0.000000e+00> : vector<128x16xf32>
    %22 = tpu.matmul %20, %21, %cst_11 {dimension_numbers = #tpu.dot_dimension_numbers<[1], [0], [0], [1], [0, 0, 1, 1], [], []>} : vector<128x16xf32>, vector<16x16xf32>, vector<128x16xf32> -> vector<128x16xf32>
    %23 = vector.shape_cast %22 : vector<128x16xf32> to vector<8x16x16xf32>
    %c0_12 = arith.constant 0 : index
    %c0_13 = arith.constant 0 : index
    %24 = vector.load %arg1[%c0_12, %c0_13] : memref<16x16xf32, #tpu.memory_space<vmem>>, vector<16x16xf32>
    %25 = vector.shape_cast %24 : vector<16x16xf32> to vector<1x16x16xf32>
    %26 = vector.broadcast %25 : vector<1x16x16xf32> to vector<8x16x16xf32>
    %27 = arith.mulf %19, %26 : vector<8x16x16xf32>
    %c0_14 = arith.constant 0 : index
    %c0_15 = arith.constant 0 : index
    %28 = vector.load %arg2[%c0_14, %c0_15] : memref<16x16xf32, #tpu.memory_space<vmem>>, vector<16x16xf32>
    %29 = vector.shape_cast %28 : vector<16x16xf32> to vector<1x16x16xf32>
    %30 = vector.broadcast %29 : vector<1x16x16xf32> to vector<8x16x16xf32>
    %31 = arith.mulf %23, %30 : vector<8x16x16xf32>
    %32 = arith.addf %27, %31 : vector<8x16x16xf32>
    %33 = vector.extract_strided_slice %32 {offsets = [0, 0, 0], sizes = [4, 16, 16], strides = [1, 1, 1]} : vector<8x16x16xf32> to vector<4x16x16xf32>
    %34 = vector.extract_strided_slice %32 {offsets = [4, 0, 0], sizes = [4, 16, 16], strides = [1, 1, 1]} : vector<8x16x16xf32> to vector<4x16x16xf32>
    %35 = vector.extract_strided_slice %18 {offsets = [8, 0, 0], sizes = [4, 16, 16], strides = [1, 1, 1]} : vector<12x16x16xf32> to vector<4x16x16xf32>
    %36 = arith.truncf %33 : vector<4x16x16xf32> to vector<4x16x16xbf16>
    %37 = arith.truncf %34 : vector<4x16x16xf32> to vector<4x16x16xbf16>
    "tpu.trace_start"() <{level = 10 : i32, message = "hqd,hkd->hqk"}> : () -> ()
    %cst_16 = arith.constant dense<0.000000e+00> : vector<4x16x16xf32>
    %38 = tpu.matmul %36, %37, %cst_16 {dimension_numbers = #tpu.dot_dimension_numbers<[2], [2], [1], [1], [0, 0, 0, 1, 1, 1], [0], [0]>} : vector<4x16x16xbf16>, vector<4x16x16xbf16>, vector<4x16x16xf32> -> vector<4x16x16xf32>
    "tpu.trace_stop"() : () -> ()
    %cst_17 = arith.constant 2.500000e-01 : f32
    %39 = vector.broadcast %cst_17 : f32 to vector<4x16x16xf32>
    %40 = arith.mulf %38, %39 : vector<4x16x16xf32>
    %c0_18 = arith.constant 0 : index
    %c0_19 = arith.constant 0 : index
    %41 = vector.load %arg4[%c0_18, %c0_19] : memref<16x16xf32, #tpu.memory_space<vmem>>, vector<16x16xf32>
    %42 = vector.shape_cast %41 : vector<16x16xf32> to vector<1x16x16xf32>
    %43 = vector.broadcast %42 : vector<1x16x16xf32> to vector<4x16x16xf32>
    %44 = arith.addf %40, %43 : vector<4x16x16xf32>
    %cst_20 = arith.constant dense<0xFF800000> : vector<4x16xf32>
    %45 = vector.multi_reduction <maximumf>, %44, %cst_20 [2] : vector<4x16x16xf32> to vector<4x16xf32>
    %46 = vector.shape_cast %45 : vector<4x16xf32> to vector<4x16x1xf32>
    %47 = vector.broadcast %46 : vector<4x16x1xf32> to vector<4x16x16xf32>
    %48 = arith.subf %44, %47 : vector<4x16x16xf32>
    %49 = math.exp %48 : vector<4x16x16xf32>
    %cst_21 = arith.constant dense<0.000000e+00> : vector<4x16xf32>
    %50 = vector.multi_reduction <add>, %49, %cst_21 [2] : vector<4x16x16xf32> to vector<4x16xf32>
    %51 = vector.shape_cast %50 : vector<4x16xf32> to vector<4x16x1xf32>
    %52 = tpu.reciprocal %51 {approx = true} : vector<4x16x1xf32> -> vector<4x16x1xf32>
    %53 = vector.broadcast %52 : vector<4x16x1xf32> to vector<4x16x16xf32>
    %54 = arith.mulf %49, %53 : vector<4x16x16xf32>
    %55 = arith.truncf %54 : vector<4x16x16xf32> to vector<4x16x16xbf16>
    %56 = arith.truncf %35 : vector<4x16x16xf32> to vector<4x16x16xbf16>
    "tpu.trace_start"() <{level = 10 : i32, message = "hqk,hkd->hqd"}> : () -> ()
    %cst_22 = arith.constant dense<0.000000e+00> : vector<4x16x16xf32>
    %57 = tpu.matmul %55, %56, %cst_22 {dimension_numbers = #tpu.dot_dimension_numbers<[2], [1], [1], [2], [0, 0, 0, 1, 1, 2], [0], [0]>} : vector<4x16x16xbf16>, vector<4x16x16xbf16>, vector<4x16x16xf32> -> vector<4x16x16xf32>
    "tpu.trace_stop"() : () -> ()
    %58 = arith.truncf %57 : vector<4x16x16xf32> to vector<4x16x16xbf16>
    %c0_23 = arith.constant 0 : index
    %c0_24 = arith.constant 0 : index
    %c0_25 = arith.constant 0 : index
    %59 = vector.load %arg7[%c0_23, %c0_24, %c0_25] : memref<4x16x64xbf16, #tpu.memory_space<vmem>>, vector<4x16x64xbf16>
    "tpu.trace_start"() <{level = 10 : i32, message = "hqd,hdk->hqk"}> : () -> ()
    %cst_26 = arith.constant dense<0.000000e+00> : vector<4x16x64xf32>
    %60 = tpu.matmul %58, %59, %cst_26 {dimension_numbers = #tpu.dot_dimension_numbers<[2], [1], [1], [2], [0, 0, 0, 1, 1, 2], [0], [0]>} : vector<4x16x16xbf16>, vector<4x16x64xbf16>, vector<4x16x64xf32> -> vector<4x16x64xf32>
    "tpu.trace_stop"() : () -> ()
    %cst_27 = arith.constant dense<0.000000e+00> : vector<16x64xf32>
    %61 = vector.multi_reduction <add>, %60, %cst_27 [0] : vector<4x16x64xf32> to vector<16x64xf32>
    %62 = arith.addf %0, %61 : vector<16x64xf32>
    %63 = arith.mulf %62, %62 : vector<16x64xf32>
    %cst_28 = arith.constant dense<0.000000e+00> : vector<16xf32>
    %64 = vector.multi_reduction <add>, %63, %cst_28 [1] : vector<16x64xf32> to vector<16xf32>
    %65 = vector.shape_cast %64 : vector<16xf32> to vector<16x1xf32>
    %cst_29 = arith.constant 6.400000e+01 : f32
    %66 = vector.broadcast %cst_29 : f32 to vector<16x1xf32>
    %67 = arith.divf %65, %66 : vector<16x1xf32>
    %cst_30 = arith.constant 9.99999974E-6 : f32
    %68 = vector.broadcast %cst_30 : f32 to vector<16x1xf32>
    %69 = arith.addf %67, %68 : vector<16x1xf32>
    %70 = math.rsqrt %69 : vector<16x1xf32>
    %71 = vector.broadcast %70 : vector<16x1xf32> to vector<16x64xf32>
    %72 = arith.mulf %62, %71 : vector<16x64xf32>
    %c0_31 = arith.constant 0 : index
    %c0_32 = arith.constant 0 : index
    %73 = vector.load %arg8[%c0_31, %c0_32] : memref<1x64xf32, #tpu.memory_space<vmem>>, vector<1x64xf32>
    %74 = vector.broadcast %73 : vector<1x64xf32> to vector<16x64xf32>
    %75 = arith.mulf %72, %74 : vector<16x64xf32>
    %76 = arith.truncf %75 : vector<16x64xf32> to vector<16x64xbf16>
    %c0_33 = arith.constant 0 : index
    %c0_34 = arith.constant 0 : index
    %77 = vector.load %arg9[%c0_33, %c0_34] : memref<64x256xbf16, #tpu.memory_space<vmem>>, vector<64x256xbf16>
    %cst_35 = arith.constant dense<0.000000e+00> : vector<16x256xf32>
    %78 = tpu.matmul %76, %77, %cst_35 {dimension_numbers = #tpu.dot_dimension_numbers<[1], [0], [0], [1], [0, 0, 1, 1], [], []>} : vector<16x64xbf16>, vector<64x256xbf16>, vector<16x256xf32> -> vector<16x256xf32>
    %79 = vector.extract_strided_slice %78 {offsets = [0, 0], sizes = [16, 128], strides = [1, 1]} : vector<16x256xf32> to vector<16x128xf32>
    %80 = vector.extract_strided_slice %78 {offsets = [0, 128], sizes = [16, 128], strides = [1, 1]} : vector<16x256xf32> to vector<16x128xf32>
    %81 = arith.negf %79 : vector<16x128xf32>
    %82 = math.exp %81 : vector<16x128xf32>
    %cst_36 = arith.constant 1.000000e+00 : f32
    %83 = vector.broadcast %cst_36 : f32 to vector<16x128xf32>
    %84 = arith.addf %83, %82 : vector<16x128xf32>
    %85 = arith.divf %83, %84 : vector<16x128xf32>
    %86 = arith.mulf %79, %85 : vector<16x128xf32>
    %87 = arith.mulf %80, %86 : vector<16x128xf32>
    %88 = arith.truncf %87 : vector<16x128xf32> to vector<16x128xbf16>
    %c0_37 = arith.constant 0 : index
    %c0_38 = arith.constant 0 : index
    %89 = vector.load %arg10[%c0_37, %c0_38] : memref<128x64xbf16, #tpu.memory_space<vmem>>, vector<128x64xbf16>
    %cst_39 = arith.constant dense<0.000000e+00> : vector<16x64xf32>
    %90 = tpu.matmul %88, %89, %cst_39 {dimension_numbers = #tpu.dot_dimension_numbers<[1], [0], [0], [1], [0, 0, 1, 1], [], []>} : vector<16x128xbf16>, vector<128x64xbf16>, vector<16x64xf32> -> vector<16x64xf32>
    %91 = arith.addf %62, %90 : vector<16x64xf32>
    %c0_40 = arith.constant 0 : index
    %c0_41 = arith.constant 0 : index
    %92 = vector.load %arg11[%c0_40, %c0_41] : memref<16x64xf32, #tpu.memory_space<vmem>>, vector<16x64xf32>
    tpu.vector_store %arg11[%c0_40, %c0_41], %91 {strides = array<i32>} : memref<16x64xf32, #tpu.memory_space<vmem>>, vector<16x64xf32>,
    return
  }
}

</mosaic_0001>

<llo_original>
// kernel: phi3_decoder_layer.1
$region0: #{phi3_decoder_layer.1}
  #allocation0 [shape = 'u32[]', space=smem, size = 0x4, offset = 0x4, fixed_abs, tag = 'smem constant byte address 0x4 - core index']
  #allocation1 [shape = 'u32[144,128]{1,0:T(1,128)}', space=vmem, size = 0x12000, scoped, tag = 'internal scratch']
  %s0 = inlined_call_operand.vmem [shape: f32[16,64], index: 0, kind: input, shape index: {}]
  %s1 = inlined_call_operand.vmem [shape: f32[16,16], index: 1, kind: input, shape index: {}]
  %s2 = inlined_call_operand.vmem [shape: f32[16,16], index: 2, kind: input, shape index: {}]
  %s3 = inlined_call_operand.vmem [shape: f32[16,16], index: 3, kind: input, shape index: {}]
  %s4 = inlined_call_operand.vmem [shape: f32[16,16], index: 4, kind: input, shape index: {}]
  %s5 = inlined_call_operand.vmem [shape: f32[1,64], index: 5, kind: input, shape index: {}]
  %s6 = inlined_call_operand.vmem [shape: bf16[12,64,16], index: 6, kind: input, shape index: {}]
  %s7 = inlined_call_operand.vmem [shape: bf16[4,16,64], index: 7, kind: input, shape index: {}]
  %s8 = inlined_call_operand.vmem [shape: f32[1,64], index: 8, kind: input, shape index: {}]
  %s9 = inlined_call_operand.vmem [shape: bf16[64,256], index: 9, kind: input, shape index: {}]
  %s10 = inlined_call_operand.vmem [shape: bf16[128,64], index: 10, kind: input, shape index: {}]
  %s11 = inlined_call_operand.hbm [shape: f32[16,64], index: 11, kind: output, shape index: {}]
  %s12 = sld [smem:[#allocation0]]
  $region54: #{phi3_decoder_layer.1} parent=0
    _
  %s14 = ssub.s32 1, %s12
  %s15 = scalar_select 0, %s14, %s12
  $region1: #{phi3_decoder_layer.1} parent=0
    #allocation2 [shape = 'u8[8192]{0}', space=vmem, size = 0x2000, scoped, tag = 'output window, operand 0, single buffered']
    #allocation3 [shape = 's32[1]{0}', space=sflag, size = 0x4, scoped, tag = 'scoped memory for phi3_decoder_layer.1']
    %16 = vsyncpa [#allocation3], 0
    // Predicated region
    $region2: #{phi3_decoder_layer.1} parent=1 // pred_check
      _
    $region3: #{phi3_decoder_layer.1} parent=1 // pred_check_branch
      %18 = sbr.rel (0) target = $region5
    $region4: #{phi3_decoder_layer.1} parent=1 // pred_region
      _
    $region5: #{phi3_decoder_layer.1} parent=1 // pred_fallthru
      _
    // Predicated region
    $region6: #{phi3_decoder_layer.1} parent=1 // pred_check
      _
    $region7: #{phi3_decoder_layer.1} parent=1 // pred_check_branch
      %20 = sbr.rel (0) target = $region9
    $region8: #{phi3_decoder_layer.1} parent=1 // pred_region
      _
    $region9: #{phi3_decoder_layer.1} parent=1 // pred_fallthru
      _
    // Predicated region
    $region10: #{phi3_decoder_layer.1} parent=1 // pred_check
      _
    $region11: #{phi3_decoder_layer.1} parent=1 // pred_check_branch
      %22 = sbr.rel (0) target = $region13
    $region12: #{phi3_decoder_layer.1} parent=1 // pred_region
      _
    $region13: #{phi3_decoder_layer.1} parent=1 // pred_fallthru
      _
    // Predicated region
    $region14: #{phi3_decoder_layer.1} parent=1 // pred_check
      _
    $region15: #{phi3_decoder_layer.1} parent=1 // pred_check_branch
      %24 = sbr.rel (0) target = $region17
    $region16: #{phi3_decoder_layer.1} parent=1 // pred_region
      _
    $region17: #{phi3_decoder_layer.1} parent=1 // pred_fallthru
      _
    // Predicated region
    $region18: #{phi3_decoder_layer.1} parent=1 // pred_check
      _
    $region19: #{phi3_decoder_layer.1} parent=1 // pred_check_branch
      %26 = sbr.rel (0) target = $region21
    $region20: #{phi3_decoder_layer.1} parent=1 // pred_region
      _
    $region21: #{phi3_decoder_layer.1} parent=1 // pred_fallthru
      _
    // Predicated region
    $region22: #{phi3_decoder_layer.1} parent=1 // pred_check
      _
    $region23: #{phi3_decoder_layer.1} parent=1 // pred_check_branch
      %28 = sbr.rel (0) target = $region25
    $region24: #{phi3_decoder_layer.1} parent=1 // pred_region
      _
    $region25: #{phi3_decoder_layer.1} parent=1 // pred_fallthru
      _
    // Predicated region
    $region26: #{phi3_decoder_layer.1} parent=1 // pred_check
      _
    $region27: #{phi3_decoder_layer.1} parent=1 // pred_check_branch
      %30 = sbr.rel (0) target = $region29
    $region28: #{phi3_decoder_layer.1} parent=1 // pred_region
      _
    $region29: #{phi3_decoder_layer.1} parent=1 // pred_fallthru
      _
    // Predicated region
    $region30: #{phi3_decoder_layer.1} parent=1 // pred_check
      _
    $region31: #{phi3_decoder_layer.1} parent=1 // pred_check_branch
      %32 = sbr.rel (0) target = $region33
    $region32: #{phi3_decoder_layer.1} parent=1 // pred_region
      _
    $region33: #{phi3_decoder_layer.1} parent=1 // pred_fallthru
      _
    // Predicated region
    $region34: #{phi3_decoder_layer.1} parent=1 // pred_check
      _
    $region35: #{phi3_decoder_layer.1} parent=1 // pred_check_branch
      %34 = sbr.rel (0) target = $region37
    $region36: #{phi3_decoder_layer.1} parent=1 // pred_region
      _
    $region37: #{phi3_decoder_layer.1} parent=1 // pred_fallthru
      _
    // Predicated region
    $region38: #{phi3_decoder_layer.1} parent=1 // pred_check
      _
    $region39: #{phi3_decoder_layer.1} parent=1 // pred_check_branch
      %36 = sbr.rel (0) target = $region41
    $region40: #{phi3_decoder_layer.1} parent=1 // pred_region
      _
    $region41: #{phi3_decoder_layer.1} parent=1 // pred_fallthru
      _
    // Predicated region
    $region42: #{phi3_decoder_layer.1} parent=1 // pred_check
      _
    $region43: #{phi3_decoder_layer.1} parent=1 // pred_check_branch
      %38 = sbr.rel (0) target = $region45
    $region44: #{phi3_decoder_layer.1} parent=1 // pred_region
      _
    $region45: #{phi3_decoder_layer.1} parent=1 // pred_fallthru
      _
    %v40 = vld [vmem:[%s0] sm:$0xff]
    %v41 = vld [vmem:[%s0 + $0x8] sm:$0xff]
    %v42 = vmul.f32 %v40, %v40
    %v43 = vmul.f32 %v41, %v41
    %vm44 = vcmask 523264
    %v45 = vsel %vm44, %v42, 0.0
    %46 = vadd.xlane.f32.xlu0 %v45
    %v47 = vpop.xlane.xlu0 %46
    %v48 = vsel %vm44, %v43, 0.0
    %49 = vadd.xlane.f32.xlu0 %v48
    %v50 = vpop.xlane.xlu0 %49
    %v51 = vrcp.pop 64.0
    %v52 = vmul.f32 %v47, %v51
    %v53 = vmul.f32 %v50, %v51
    %v54 = vadd.f32 %v52, 1e-05
    %v55 = vadd.f32 %v53, 1e-05
    %v56 = vrsqrt.pop %v54
    %v57 = vrsqrt.pop %v55
    %v58 = vmul.f32 %v40, %v56
    %v59 = vmul.f32 %v41, %v57
    %v60 = vld [vmem:[%s5] sm:$0x1]
    %v62 = vlaneseq
    %v63 = vshrl.u32 %v62, 7
    %v64 = vsub.s32 0, %v63
    %v65 = vrot.slane %v60, %v64
    %v67 = vmul.f32 %v58, %v65
    %v68 = vmul.f32 %v59, %v65
    %v69 = vpack.c.bf16 %v68, %v67
    %v70 = vld [vmem:[%s6] sm:$0xf]
    %v71 = vld [vmem:[%s6 + $0x4] sm:$0xf]
    %v72 = vld [vmem:[%s6 + $0x8] sm:$0xf]
    %v73 = vld [vmem:[%s6 + $0xc] sm:$0xf]
    %v74 = vld [vmem:[%s6 + $0x10] sm:$0xf]
    %v75 = vld [vmem:[%s6 + $0x14] sm:$0xf]
    %v76 = vld [vmem:[%s6 + $0x18] sm:$0xf]
    %v77 = vld [vmem:[%s6 + $0x1c] sm:$0xf]
    %v78 = vld [vmem:[%s6 + $0x20] sm:$0xf]
    %v79 = vld [vmem:[%s6 + $0x24] sm:$0xf]
    %v80 = vld [vmem:[%s6 + $0x28] sm:$0xf]
    %v81 = vld [vmem:[%s6 + $0x2c] sm:$0xf]
    %v82 = vld [vmem:[%s6 + $0x30] sm:$0xf]
    %v83 = vld [vmem:[%s6 + $0x34] sm:$0xf]
    %v84 = vld [vmem:[%s6 + $0x38] sm:$0xf]
    %v85 = vld [vmem:[%s6 + $0x3c] sm:$0xf]
    %v86 = vld [vmem:[%s6 + $0x40] sm:$0xf]
    %v87 = vld [vmem:[%s6 + $0x44] sm:$0xf]
    %v88 = vld [vmem:[%s6 + $0x48] sm:$0xf]
    %v89 = vld [vmem:[%s6 + $0x4c] sm:$0xf]
    %v90 = vld [vmem:[%s6 + $0x50] sm:$0xf]
    %v91 = vld [vmem:[%s6 + $0x54] sm:$0xf]
    %v92 = vld [vmem:[%s6 + $0x58] sm:$0xf]
    %v93 = vld [vmem:[%s6 + $0x5c] sm:$0xf]
    %v94 = vld [vmem:[%s6 + $0x60] sm:$0xf]
    %v95 = vld [vmem:[%s6 + $0x64] sm:$0xf]
    %v96 = vld [vmem:[%s6 + $0x68] sm:$0xf]
    %v97 = vld [vmem:[%s6 + $0x6c] sm:$0xf]
    %v98 = vld [vmem:[%s6 + $0x70] sm:$0xf]
    %v99 = vld [vmem:[%s6 + $0x74] sm:$0xf]
    %v100 = vld [vmem:[%s6 + $0x78] sm:$0xf]
    %v101 = vld [vmem:[%s6 + $0x7c] sm:$0xf]
    %v102 = vld [vmem:[%s6 + $0x80] sm:$0xf]
    %v103 = vld [vmem:[%s6 + $0x84] sm:$0xf]
    %v104 = vld [vmem:[%s6 + $0x88] sm:$0xf]
    %v105 = vld [vmem:[%s6 + $0x8c] sm:$0xf]
    %v106 = vld [vmem:[%s6 + $0x90] sm:$0xf]
    %v107 = vld [vmem:[%s6 + $0x94] sm:$0xf]
    %v108 = vld [vmem:[%s6 + $0x98] sm:$0xf]
    %v109 = vld [vmem:[%s6 + $0x9c] sm:$0xf]
    %v110 = vld [vmem:[%s6 + $0xa0] sm:$0xf]
    %v111 = vld [vmem:[%s6 + $0xa4] sm:$0xf]
    %v112 = vld [vmem:[%s6 + $0xa8] sm:$0xf]
    %v113 = vld [vmem:[%s6 + $0xac] sm:$0xf]
    %v114 = vld [vmem:[%s6 + $0xb0] sm:$0xf]
    %v115 = vld [vmem:[%s6 + $0xb4] sm:$0xf]
    %v116 = vld [vmem:[%s6 + $0xb8] sm:$0xf]
    %v117 = vld [vmem:[%s6 + $0xbc] sm:$0xf]
    %v118 = vld [vmem:[%s6 + $0xc0] sm:$0xf]
    %v119 = vld [vmem:[%s6 + $0xc4] sm:$0xf]
    %v120 = vld [vmem:[%s6 + $0xc8] sm:$0xf]
    %v121 = vld [vmem:[%s6 + $0xcc] sm:$0xf]
    %v122 = vld [vmem:[%s6 + $0xd0] sm:$0xf]
    %v123 = vld [vmem:[%s6 + $0xd4] sm:$0xf]
    %v124 = vld [vmem:[%s6 + $0xd8] sm:$0xf]
    %v125 = vld [vmem:[%s6 + $0xdc] sm:$0xf]
    %v126 = vld [vmem:[%s6 + $0xe0] sm:$0xf]
    %v127 = vld [vmem:[%s6 + $0xe4] sm:$0xf]
    %v128 = vld [vmem:[%s6 + $0xe8] sm:$0xf]
    %v129 = vld [vmem:[%s6 + $0xec] sm:$0xf]
    %v130 = vld [vmem:[%s6 + $0xf0] sm:$0xf]
    %v131 = vld [vmem:[%s6 + $0xf4] sm:$0xf]
    %v132 = vld [vmem:[%s6 + $0xf8] sm:$0xf]
    %v133 = vld [vmem:[%s6 + $0xfc] sm:$0xf]
    %v134 = vld [vmem:[%s6 + $0x100] sm:$0xf]
    %v135 = vld [vmem:[%s6 + $0x104] sm:$0xf]
    %v136 = vld [vmem:[%s6 + $0x108] sm:$0xf]
    %v137 = vld [vmem:[%s6 + $0x10c] sm:$0xf]
    %v138 = vld [vmem:[%s6 + $0x110] sm:$0xf]
    %v139 = vld [vmem:[%s6 + $0x114] sm:$0xf]
    %v140 = vld [vmem:[%s6 + $0x118] sm:$0xf]
    %v141 = vld [vmem:[%s6 + $0x11c] sm:$0xf]
    %v142 = vld [vmem:[%s6 + $0x120] sm:$0xf]
    %v143 = vld [vmem:[%s6 + $0x124] sm:$0xf]
    %v144 = vld [vmem:[%s6 + $0x128] sm:$0xf]
    %v145 = vld [vmem:[%s6 + $0x12c] sm:$0xf]
    %v146 = vld [vmem:[%s6 + $0x130] sm:$0xf]
    %v147 = vld [vmem:[%s6 + $0x134] sm:$0xf]
    %v148 = vld [vmem:[%s6 + $0x138] sm:$0xf]
    %v149 = vld [vmem:[%s6 + $0x13c] sm:$0xf]
    %v150 = vld [vmem:[%s6 + $0x140] sm:$0xf]
    %v151 = vld [vmem:[%s6 + $0x144] sm:$0xf]
    %v152 = vld [vmem:[%s6 + $0x148] sm:$0xf]
    %v153 = vld [vmem:[%s6 + $0x14c] sm:$0xf]
    %v154 = vld [vmem:[%s6 + $0x150] sm:$0xf]
    %v155 = vld [vmem:[%s6 + $0x154] sm:$0xf]
    %v156 = vld [vmem:[%s6 + $0x158] sm:$0xf]
    %v157 = vld [vmem:[%s6 + $0x15c] sm:$0xf]
    %v158 = vld [vmem:[%s6 + $0x160] sm:$0xf]
    %v159 = vld [vmem:[%s6 + $0x164] sm:$0xf]
    %v160 = vld [vmem:[%s6 + $0x168] sm:$0xf]
    %v161 = vld [vmem:[%s6 + $0x16c] sm:$0xf]
    %v162 = vld [vmem:[%s6 + $0x170] sm:$0xf]
    %v163 = vld [vmem:[%s6 + $0x174] sm:$0xf]
    %v164 = vld [vmem:[%s6 + $0x178] sm:$0xf]
    %v165 = vld [vmem:[%s6 + $0x17c] sm:$0xf]
    %v174 = vunpack.c.l.b16 %v70
    %v175 = vunpack.c.l.b16 %v71
    %v176 = vunpack.c.l.b16 %v72
    %v177 = vunpack.c.l.b16 %v73
    %v178 = vunpack.c.l.b16 %v74
    %v179 = vunpack.c.l.b16 %v75
    %v180 = vunpack.c.l.b16 %v76
    %v181 = vunpack.c.l.b16 %v77
    %v182 = vpack.c.b16 %v175, %v174
    %v183 = vpack.c.b16 %v177, %v176
    %v184 = vpack.c.b16 %v179, %v178
    %v185 = vpack.c.b16 %v181, %v180
    %v191 = vsel %vm44, %v69, 0
    %193 = vmatprep.subr.bf16.mxu0 0
    %194 = vmatpush1.bf16.msra.mxu0 0
    %195 = vmatprep.subr.bf16.mxu0 0
    %196 = vmatpush1.bf16.msra.mxu0 0
    %197 = vmatprep.subr.bf16.mxu0 0
    %198 = vmatpush1.bf16.msra.mxu0 0
    %199 = vmatprep.subr.bf16.mxu0 0
    %200 = vmatpush1.bf16.msra.mxu0 0
    %201 = vmatprep.subr.bf16.mxu0 0
    %202 = vmatpush1.bf16.msra.mxu0 %v185
    %203 = vmatprep.subr.bf16.mxu0 0
    %204 = vmatpush1.bf16.msra.mxu0 %v184
    %205 = vmatprep.subr.bf16.mxu0 0
    %206 = vmatpush1.bf16.msra.mxu0 %v183
    %207 = vmatprep.subr.bf16.mxu0 0
    %208 = vmatpush1.bf16.msra.mxu0 %v182
    %209 = vmatprep.subr.bf16.mxu0 0
    %210 = vmatpush2.bf16.msra.mxu0 0
    %211 = vmatprep.subr.bf16.mxu0 0
    %212 = vmatpush2.bf16.msra.mxu0 0
    %213 = vmatprep.subr.bf16.mxu0 0
    %214 = vmatpush2.bf16.msra.mxu0 0
    %215 = vmatprep.subr.bf16.mxu0 0
    %216 = vmatpush2.bf16.msra.mxu0 0
    %217 = vmatprep.subr.bf16.mxu0 0
    %218 = vmatpush2.bf16.msra.mxu0 0
    %219 = vmatprep.subr.bf16.mxu0 0
    %220 = vmatpush2.bf16.msra.mxu0 0
    %221 = vmatprep.subr.bf16.mxu0 0
    %222 = vmatpush2.bf16.msra.mxu0 0
    %223 = vmatprep.subr.bf16.mxu0 0
    %224 = vmatpush2.bf16.msra.mxu0 0
    %225 = vmatprep.mubr.bf16.mxu0 0
    %226 = vmatmul.mubr.bf16.gmra.mxu0 %v191
    %v227 = vpop.f32.mrf.mxu0
    %v228 = vadd.f32 0.0, %v227
    %v229 = vpop.f32.mrf.mxu0
    %v230 = vpop.f32.mrf.mxu0
    %v231 = vadd.f32 0.0, %v230
    %v232 = vpop.f32.mrf.mxu0
    %233 = vdwg.mxu0
    %v242 = vunpack.c.l.b16 %v78
    %v243 = vunpack.c.l.b16 %v79
    %v244 = vunpack.c.l.b16 %v80
    %v245 = vunpack.c.l.b16 %v81
    %v246 = vunpack.c.l.b16 %v82
    %v247 = vunpack.c.l.b16 %v83
    %v248 = vunpack.c.l.b16 %v84
    %v249 = vunpack.c.l.b16 %v85
    %v250 = vpack.c.b16 %v243, %v242
    %v251 = vpack.c.b16 %v245, %v244
    %v252 = vpack.c.b16 %v247, %v246
    %v253 = vpack.c.b16 %v249, %v248
    %258 = vmatprep.subr.bf16.mxu0 0
    %259 = vmatpush1.bf16.msra.mxu0 0
    %260 = vmatprep.subr.bf16.mxu0 0
    %261 = vmatpush1.bf16.msra.mxu0 0
    %262 = vmatprep.subr.bf16.mxu0 0
    %263 = vmatpush1.bf16.msra.mxu0 0
    %264 = vmatprep.subr.bf16.mxu0 0
    %265 = vmatpush1.bf16.msra.mxu0 0
    %266 = vmatprep.subr.bf16.mxu0 0
    %267 = vmatpush1.bf16.msra.mxu0 %v253
    %268 = vmatprep.subr.bf16.mxu0 0
    %269 = vmatpush1.bf16.msra.mxu0 %v252
    %270 = vmatprep.subr.bf16.mxu0 0
    %271 = vmatpush1.bf16.msra.mxu0 %v251
    %272 = vmatprep.subr.bf16.mxu0 0
    %273 = vmatpush1.bf16.msra.mxu0 %v250
    %274 = vmatprep.subr.bf16.mxu0 0
    %275 = vmatpush2.bf16.msra.mxu0 0
    %276 = vmatprep.subr.bf16.mxu0 0
    %277 = vmatpush2.bf16.msra.mxu0 0
    %278 = vmatprep.subr.bf16.mxu0 0
    %279 = vmatpush2.bf16.msra.mxu0 0
    %280 = vmatprep.subr.bf16.mxu0 0
    %281 = vmatpush2.bf16.msra.mxu0 0
    %282 = vmatprep.subr.bf16.mxu0 0
    %283 = vmatpush2.bf16.msra.mxu0 0
    %284 = vmatprep.subr.bf16.mxu0 0
    %285 = vmatpush2.bf16.msra.mxu0 0
    %286 = vmatprep.subr.bf16.mxu0 0
    %287 = vmatpush2.bf16.msra.mxu0 0
    %288 = vmatprep.subr.bf16.mxu0 0
    %289 = vmatpush2.bf16.msra.mxu0 0
    %290 = vmatprep.mubr.bf16.mxu0 0
    %291 = vmatmul.mubr.bf16.gmra.mxu0 %v191
    %v292 = vpop.f32.mrf.mxu0
    %v293 = vadd.f32 0.0, %v292
    %v294 = vpop.f32.mrf.mxu0
    %v295 = vpop.f32.mrf.mxu0
    %v296 = vadd.f32 0.0, %v295
    %v297 = vpop.f32.mrf.mxu0
    %298 = vdwg.mxu0
    %v307 = vunpack.c.l.b16 %v86
    %v308 = vunpack.c.l.b16 %v87
    %v309 = vunpack.c.l.b16 %v88
    %v310 = vunpack.c.l.b16 %v89
    %v311 = vunpack.c.l.b16 %v90
    %v312 = vunpack.c.l.b16 %v91
    %v313 = vunpack.c.l.b16 %v92
    %v314 = vunpack.c.l.b16 %v93
    %v315 = vpack.c.b16 %v308, %v307
    %v316 = vpack.c.b16 %v310, %v309
    %v317 = vpack.c.b16 %v312, %v311
    %v318 = vpack.c.b16 %v314, %v313
    %323 = vmatprep.subr.bf16.mxu0 0
    %324 = vmatpush1.bf16.msra.mxu0 0
    %325 = vmatprep.subr.bf16.mxu0 0
    %326 = vmatpush1.bf16.msra.mxu0 0
    %327 = vmatprep.subr.bf16.mxu0 0
    %328 = vmatpush1.bf16.msra.mxu0 0
    %329 = vmatprep.subr.bf16.mxu0 0
    %330 = vmatpush1.bf16.msra.mxu0 0
    %331 = vmatprep.subr.bf16.mxu0 0
    %332 = vmatpush1.bf16.msra.mxu0 %v318
    %333 = vmatprep.subr.bf16.mxu0 0
    %334 = vmatpush1.bf16.msra.mxu0 %v317
    %335 = vmatprep.subr.bf16.mxu0 0
    %336 = vmatpush1.bf16.msra.mxu0 %v316
    %337 = vmatprep.subr.bf16.mxu0 0
    %338 = vmatpush1.bf16.msra.mxu0 %v315
    %339 = vmatprep.subr.bf16.mxu0 0
    %340 = vmatpush2.bf16.msra.mxu0 0
    %341 = vmatprep.subr.bf16.mxu0 0
    %342 = vmatpush2.bf16.msra.mxu0 0
    %343 = vmatprep.subr.bf16.mxu0 0
    %344 = vmatpush2.bf16.msra.mxu0 0
    %345 = vmatprep.subr.bf16.mxu0 0
    %346 = vmatpush2.bf16.msra.mxu0 0
    %347 = vmatprep.subr.bf16.mxu0 0
    %348 = vmatpush2.bf16.msra.mxu0 0
    %349 = vmatprep.subr.bf16.mxu0 0
    %350 = vmatpush2.bf16.msra.mxu0 0
    %351 = vmatprep.subr.bf16.mxu0 0
    %352 = vmatpush2.bf16.msra.mxu0 0
    %353 = vmatprep.subr.bf16.mxu0 0
    %354 = vmatpush2.bf16.msra.mxu0 0
    %355 = vmatprep.mubr.bf16.mxu0 0
    %356 = vmatmul.mubr.bf16.gmra.mxu0 %v191
    %v357 = vpop.f32.mrf.mxu0
    %v358 = vadd.f32 0.0, %v357
    %v359 = vpop.f32.mrf.mxu0
    %v360 = vpop.f32.mrf.mxu0
    %v361 = vadd.f32 0.0, %v360
    %v362 = vpop.f32.mrf.mxu0
    %363 = vdwg.mxu0
    %v372 = vunpack.c.l.b16 %v94
    %v373 = vunpack.c.l.b16 %v95
    %v374 = vunpack.c.l.b16 %v96
    %v375 = vunpack.c.l.b16 %v97
    %v376 = vunpack.c.l.b16 %v98
    %v377 = vunpack.c.l.b16 %v99
    %v378 = vunpack.c.l.b16 %v100
    %v379 = vunpack.c.l.b16 %v101
    %v380 = vpack.c.b16 %v373, %v372
    %v381 = vpack.c.b16 %v375, %v374
    %v382 = vpack.c.b16 %v377, %v376
    %v383 = vpack.c.b16 %v379, %v378
    %388 = vmatprep.subr.bf16.mxu0 0
    %389 = vmatpush1.bf16.msra.mxu0 0
    %390 = vmatprep.subr.bf16.mxu0 0
    %391 = vmatpush1.bf16.msra.mxu0 0
    %392 = vmatprep.subr.bf16.mxu0 0
    %393 = vmatpush1.bf16.msra.mxu0 0
    %394 = vmatprep.subr.bf16.mxu0 0
    %395 = vmatpush1.bf16.msra.mxu0 0
    %396 = vmatprep.subr.bf16.mxu0 0
    %397 = vmatpush1.bf16.msra.mxu0 %v383
    %398 = vmatprep.subr.bf16.mxu0 0
    %399 = vmatpush1.bf16.msra.mxu0 %v382
    %400 = vmatprep.subr.bf16.mxu0 0
    %401 = vmatpush1.bf16.msra.mxu0 %v381
    %402 = vmatprep.subr.bf16.mxu0 0
    %403 = vmatpush1.bf16.msra.mxu0 %v380
    %404 = vmatprep.subr.bf16.mxu0 0
    %405 = vmatpush2.bf16.msra.mxu0 0
    %406 = vmatprep.subr.bf16.mxu0 0
    %407 = vmatpush2.bf16.msra.mxu0 0
    %408 = vmatprep.subr.bf16.mxu0 0
    %409 = vmatpush2.bf16.msra.mxu0 0
    %410 = vmatprep.subr.bf16.mxu0 0
    %411 = vmatpush2.bf16.msra.mxu0 0
    %412 = vmatprep.subr.bf16.mxu0 0
    %413 = vmatpush2.bf16.msra.mxu0 0
    %414 = vmatprep.subr.bf16.mxu0 0
    %415 = vmatpush2.bf16.msra.mxu0 0
    %416 = vmatprep.subr.bf16.mxu0 0
    %417 = vmatpush2.bf16.msra.mxu0 0
    %418 = vmatprep.subr.bf16.mxu0 0
    %419 = vmatpush2.bf16.msra.mxu0 0
    %420 = vmatprep.mubr.bf16.mxu0 0
    %421 = vmatmul.mubr.bf16.gmra.mxu0 %v191
    %v422 = vpop.f32.mrf.mxu0
    %v423 = vadd.f32 0.0, %v422
    %v424 = vpop.f32.mrf.mxu0
    %v425 = vpop.f32.mrf.mxu0
    %v426 = vadd.f32 0.0, %v425
    %v427 = vpop.f32.mrf.mxu0
    %428 = vdwg.mxu0
    %v437 = vunpack.c.l.b16 %v102
    %v438 = vunpack.c.l.b16 %v103
    %v439 = vunpack.c.l.b16 %v104
    %v440 = vunpack.c.l.b16 %v105
    %v441 = vunpack.c.l.b16 %v106
    %v442 = vunpack.c.l.b16 %v107
    %v443 = vunpack.c.l.b16 %v108
    %v444 = vunpack.c.l.b16 %v109
    %v445 = vpack.c.b16 %v438, %v437
    %v446 = vpack.c.b16 %v440, %v439
    %v447 = vpack.c.b16 %v442, %v441
    %v448 = vpack.c.b16 %v444, %v443
    %453 = vmatprep.subr.bf16.mxu0 0
    %454 = vmatpush1.bf16.msra.mxu0 0
    %455 = vmatprep.subr.bf16.mxu0 0
    %456 = vmatpush1.bf16.msra.mxu0 0
    %457 = vmatprep.subr.bf16.mxu0 0
    %458 = vmatpush1.bf16.msra.mxu0 0
    %459 = vmatprep.subr.bf16.mxu0 0
    %460 = vmatpush1.bf16.msra.mxu0 0
    %461 = vmatprep.subr.bf16.mxu0 0
    %462 = vmatpush1.bf16.msra.mxu0 %v448
    %463 = vmatprep.subr.bf16.mxu0 0
    %464 = vmatpush1.bf16.msra.mxu0 %v447
    %465 = vmatprep.subr.bf16.mxu0 0
    %466 = vmatpush1.bf16.msra.mxu0 %v446
    %467 = vmatprep.subr.bf16.mxu0 0
    %468 = vmatpush1.bf16.msra.mxu0 %v445
    %469 = vmatprep.subr.bf16.mxu0 0
    %470 = vmatpush2.bf16.msra.mxu0 0
    %471 = vmatprep.subr.bf16.mxu0 0
    %472 = vmatpush2.bf16.msra.mxu0 0
    %473 = vmatprep.subr.bf16.mxu0 0
    %474 = vmatpush2.bf16.msra.mxu0 0
    %475 = vmatprep.subr.bf16.mxu0 0
    %476 = vmatpush2.bf16.msra.mxu0 0
    %477 = vmatprep.subr.bf16.mxu0 0
    %478 = vmatpush2.bf16.msra.mxu0 0
    %479 = vmatprep.subr.bf16.mxu0 0
    %480 = vmatpush2.bf16.msra.mxu0 0
    %481 = vmatprep.subr.bf16.mxu0 0
    %482 = vmatpush2.bf16.msra.mxu0 0
    %483 = vmatprep.subr.bf16.mxu0 0
    %484 = vmatpush2.bf16.msra.mxu0 0
    %485 = vmatprep.mubr.bf16.mxu0 0
    %486 = vmatmul.mubr.bf16.gmra.mxu0 %v191
    %v487 = vpop.f32.mrf.mxu0
    %v488 = vadd.f32 0.0, %v487
    %v489 = vpop.f32.mrf.mxu0
    %v490 = vpop.f32.mrf.mxu0
    %v491 = vadd.f32 0.0, %v490
    %v492 = vpop.f32.mrf.mxu0
    %493 = vdwg.mxu0
    %v502 = vunpack.c.l.b16 %v110
    %v503 = vunpack.c.l.b16 %v111
    %v504 = vunpack.c.l.b16 %v112
    %v505 = vunpack.c.l.b16 %v113
    %v506 = vunpack.c.l.b16 %v114
    %v507 = vunpack.c.l.b16 %v115
    %v508 = vunpack.c.l.b16 %v116
    %v509 = vunpack.c.l.b16 %v117
    %v510 = vpack.c.b16 %v503, %v502
    %v511 = vpack.c.b16 %v505, %v504
    %v512 = vpack.c.b16 %v507, %v506
    %v513 = vpack.c.b16 %v509, %v508
    %518 = vmatprep.subr.bf16.mxu0 0
    %519 = vmatpush1.bf16.msra.mxu0 0
    %520 = vmatprep.subr.bf16.mxu0 0
    %521 = vmatpush1.bf16.msra.mxu0 0
    %522 = vmatprep.subr.bf16.mxu0 0
    %523 = vmatpush1.bf16.msra.mxu0 0
    %524 = vmatprep.subr.bf16.mxu0 0
    %525 = vmatpush1.bf16.msra.mxu0 0
    %526 = vmatprep.subr.bf16.mxu0 0
    %527 = vmatpush1.bf16.msra.mxu0 %v513
    %528 = vmatprep.subr.bf16.mxu0 0
    %529 = vmatpush1.bf16.msra.mxu0 %v512
    %530 = vmatprep.subr.bf16.mxu0 0
    %531 = vmatpush1.bf16.msra.mxu0 %v511
    %532 = vmatprep.subr.bf16.mxu0 0
    %533 = vmatpush1.bf16.msra.mxu0 %v510
    %534 = vmatprep.subr.bf16.mxu0 0
    %535 = vmatpush2.bf16.msra.mxu0 0
    %536 = vmatprep.subr.bf16.mxu0 0
    %537 = vmatpush2.bf16.msra.mxu0 0
    %538 = vmatprep.subr.bf16.mxu0 0
    %539 = vmatpush2.bf16.msra.mxu0 0
    %540 = vmatprep.subr.bf16.mxu0 0
    %541 = vmatpush2.bf16.msra.mxu0 0
    %542 = vmatprep.subr.bf16.mxu0 0
    %543 = vmatpush2.bf16.msra.mxu0 0
    %544 = vmatprep.subr.bf16.mxu0 0
    %545 = vmatpush2.bf16.msra.mxu0 0
    %546 = vmatprep.subr.bf16.mxu0 0
    %547 = vmatpush2.bf16.msra.mxu0 0
    %548 = vmatprep.subr.bf16.mxu0 0
    %549 = vmatpush2.bf16.msra.mxu0 0
    %550 = vmatprep.mubr.bf16.mxu0 0
    %551 = vmatmul.mubr.bf16.gmra.mxu0 %v191
    %v552 = vpop.f32.mrf.mxu0
    %v553 = vadd.f32 0.0, %v552
    %v554 = vpop.f32.mrf.mxu0
    %v555 = vpop.f32.mrf.mxu0
    %v556 = vadd.f32 0.0, %v555
    %v557 = vpop.f32.mrf.mxu0
    %558 = vdwg.mxu0
    %v567 = vunpack.c.l.b16 %v118
    %v568 = vunpack.c.l.b16 %v119
    %v569 = vunpack.c.l.b16 %v120
    %v570 = vunpack.c.l.b16 %v121
    %v571 = vunpack.c.l.b16 %v122
    %v572 = vunpack.c.l.b16 %v123
    %v573 = vunpack.c.l.b16 %v124
    %v574 = vunpack.c.l.b16 %v125
    %v575 = vpack.c.b16 %v568, %v567
    %v576 = vpack.c.b16 %v570, %v569
    %v577 = vpack.c.b16 %v572, %v571
    %v578 = vpack.c.b16 %v574, %v573
    %583 = vmatprep.subr.bf16.mxu0 0
    %584 = vmatpush1.bf16.msra.mxu0 0
    %585 = vmatprep.subr.bf16.mxu0 0
    %586 = vmatpush1.bf16.msra.mxu0 0
    %587 = vmatprep.subr.bf16.mxu0 0
    %588 = vmatpush1.bf16.msra.mxu0 0
    %589 = vmatprep.subr.bf16.mxu0 0
    %590 = vmatpush1.bf16.msra.mxu0 0
    %591 = vmatprep.subr.bf16.mxu0 0
    %592 = vmatpush1.bf16.msra.mxu0 %v578
    %593 = vmatprep.subr.bf16.mxu0 0
    %594 = vmatpush1.bf16.msra.mxu0 %v577
    %595 = vmatprep.subr.bf16.mxu0 0
    %596 = vmatpush1.bf16.msra.mxu0 %v576
    %597 = vmatprep.subr.bf16.mxu0 0
    %598 = vmatpush1.bf16.msra.mxu0 %v575
    %599 = vmatprep.subr.bf16.mxu0 0
    %600 = vmatpush2.bf16.msra.mxu0 0
    %601 = vmatprep.subr.bf16.mxu0 0
    %602 = vmatpush2.bf16.msra.mxu0 0
    %603 = vmatprep.subr.bf16.mxu0 0
    %604 = vmatpush2.bf16.msra.mxu0 0
    %605 = vmatprep.subr.bf16.mxu0 0
    %606 = vmatpush2.bf16.msra.mxu0 0
    %607 = vmatprep.subr.bf16.mxu0 0
    %608 = vmatpush2.bf16.msra.mxu0 0
    %609 = vmatprep.subr.bf16.mxu0 0
    %610 = vmatpush2.bf16.msra.mxu0 0
    %611 = vmatprep.subr.bf16.mxu0 0
    %612 = vmatpush2.bf16.msra.mxu0 0
    %613 = vmatprep.subr.bf16.mxu0 0
    %614 = vmatpush2.bf16.msra.mxu0 0
    %615 = vmatprep.mubr.bf16.mxu0 0
    %616 = vmatmul.mubr.bf16.gmra.mxu0 %v191
    %v617 = vpop.f32.mrf.mxu0
    %v618 = vadd.f32 0.0, %v617
    %v619 = vpop.f32.mrf.mxu0
    %v620 = vpop.f32.mrf.mxu0
    %v621 = vadd.f32 0.0, %v620
    %v622 = vpop.f32.mrf.mxu0
    %623 = vdwg.mxu0
    %v632 = vunpack.c.l.b16 %v126
    %v633 = vunpack.c.l.b16 %v127
    %v634 = vunpack.c.l.b16 %v128
    %v635 = vunpack.c.l.b16 %v129
    %v636 = vunpack.c.l.b16 %v130
    %v637 = vunpack.c.l.b16 %v131
    %v638 = vunpack.c.l.b16 %v132
    %v639 = vunpack.c.l.b16 %v133
    %v640 = vpack.c.b16 %v633, %v632
    %v641 = vpack.c.b16 %v635, %v634
    %v642 = vpack.c.b16 %v637, %v636
    %v643 = vpack.c.b16 %v639, %v638
    %648 = vmatprep.subr.bf16.mxu0 0
    %649 = vmatpush1.bf16.msra.mxu0 0
    %650 = vmatprep.subr.bf16.mxu0 0
    %651 = vmatpush1.bf16.msra.mxu0 0
    %652 = vmatprep.subr.bf16.mxu0 0
    %653 = vmatpush1.bf16.msra.mxu0 0
    %654 = vmatprep.subr.bf16.mxu0 0
    %655 = vmatpush1.bf16.msra.mxu0 0
    %656 = vmatprep.subr.bf16.mxu0 0
    %657 = vmatpush1.bf16.msra.mxu0 %v643
    %658 = vmatprep.subr.bf16.mxu0 0
    %659 = vmatpush1.bf16.msra.mxu0 %v642
    %660 = vmatprep.subr.bf16.mxu0 0
    %661 = vmatpush1.bf16.msra.mxu0 %v641
    %662 = vmatprep.subr.bf16.mxu0 0
    %663 = vmatpush1.bf16.msra.mxu0 %v640
    %664 = vmatprep.subr.bf16.mxu0 0
    %665 = vmatpush2.bf16.msra.mxu0 0
    %666 = vmatprep.subr.bf16.mxu0 0
    %667 = vmatpush2.bf16.msra.mxu0 0
    %668 = vmatprep.subr.bf16.mxu0 0
    %669 = vmatpush2.bf16.msra.mxu0 0
    %670 = vmatprep.subr.bf16.mxu0 0
    %671 = vmatpush2.bf16.msra.mxu0 0
    %672 = vmatprep.subr.bf16.mxu0 0
    %673 = vmatpush2.bf16.msra.mxu0 0
    %674 = vmatprep.subr.bf16.mxu0 0
    %675 = vmatpush2.bf16.msra.mxu0 0
    %676 = vmatprep.subr.bf16.mxu0 0
    %677 = vmatpush2.bf16.msra.mxu0 0
    %678 = vmatprep.subr.bf16.mxu0 0
    %679 = vmatpush2.bf16.msra.mxu0 0
    %680 = vmatprep.mubr.bf16.mxu0 0
    %681 = vmatmul.mubr.bf16.gmra.mxu0 %v191
    %v682 = vpop.f32.mrf.mxu0
    %v683 = vadd.f32 0.0, %v682
    %v684 = vpop.f32.mrf.mxu0
    %v685 = vpop.f32.mrf.mxu0
    %v686 = vadd.f32 0.0, %v685
    %v687 = vpop.f32.mrf.mxu0
    %688 = vdwg.mxu0
    %v697 = vunpack.c.l.b16 %v134
    %v698 = vunpack.c.l.b16 %v135
    %v699 = vunpack.c.l.b16 %v136
    %v700 = vunpack.c.l.b16 %v137
    %v701 = vunpack.c.l.b16 %v138
    %v702 = vunpack.c.l.b16 %v139
    %v703 = vunpack.c.l.b16 %v140
    %v704 = vunpack.c.l.b16 %v141
    %v705 = vpack.c.b16 %v698, %v697
    %v706 = vpack.c.b16 %v700, %v699
    %v707 = vpack.c.b16 %v702, %v701
    %v708 = vpack.c.b16 %v704, %v703
    %713 = vmatprep.subr.bf16.mxu0 0
    %714 = vmatpush1.bf16.msra.mxu0 0
    %715 = vmatprep.subr.bf16.mxu0 0
    %716 = vmatpush1.bf16.msra.mxu0 0
    %717 = vmatprep.subr.bf16.mxu0 0
    %718 = vmatpush1.bf16.msra.mxu0 0
    %719 = vmatprep.subr.bf16.mxu0 0
    %720 = vmatpush1.bf16.msra.mxu0 0
    %721 = vmatprep.subr.bf16.mxu0 0
    %722 = vmatpush1.bf16.msra.mxu0 %v708
    %723 = vmatprep.subr.bf16.mxu0 0
    %724 = vmatpush1.bf16.msra.mxu0 %v707
    %725 = vmatprep.subr.bf16.mxu0 0
    %726 = vmatpush1.bf16.msra.mxu0 %v706
    %727 = vmatprep.subr.bf16.mxu0 0
    %728 = vmatpush1.bf16.msra.mxu0 %v705
    %729 = vmatprep.subr.bf16.mxu0 0
    %730 = vmatpush2.bf16.msra.mxu0 0
    %731 = vmatprep.subr.bf16.mxu0 0
    %732 = vmatpush2.bf16.msra.mxu0 0
    %733 = vmatprep.subr.bf16.mxu0 0
    %734 = vmatpush2.bf16.msra.mxu0 0
    %735 = vmatprep.subr.bf16.mxu0 0
    %736 = vmatpush2.bf16.msra.mxu0 0
    %737 = vmatprep.subr.bf16.mxu0 0
    %738 = vmatpush2.bf16.msra.mxu0 0
    %739 = vmatprep.subr.bf16.mxu0 0
    %740 = vmatpush2.bf16.msra.mxu0 0
    %741 = vmatprep.subr.bf16.mxu0 0
    %742 = vmatpush2.bf16.msra.mxu0 0
    %743 = vmatprep.subr.bf16.mxu0 0
    %744 = vmatpush2.bf16.msra.mxu0 0
    %745 = vmatprep.mubr.bf16.mxu0 0
    %746 = vmatmul.mubr.bf16.gmra.mxu0 %v191
    %v747 = vpop.f32.mrf.mxu0
    %v748 = vadd.f32 0.0, %v747
    %v749 = vpop.f32.mrf.mxu0
    %v750 = vpop.f32.mrf.mxu0
    %v751 = vadd.f32 0.0, %v750
    %v752 = vpop.f32.mrf.mxu0
    %753 = vdwg.mxu0
    %v762 = vunpack.c.l.b16 %v142
    %v763 = vunpack.c.l.b16 %v143
    %v764 = vunpack.c.l.b16 %v144
    %v765 = vunpack.c.l.b16 %v145
    %v766 = vunpack.c.l.b16 %v146
    %v767 = vunpack.c.l.b16 %v147
    %v768 = vunpack.c.l.b16 %v148
    %v769 = vunpack.c.l.b16 %v149
    %v770 = vpack.c.b16 %v763, %v762
    %v771 = vpack.c.b16 %v765, %v764
    %v772 = vpack.c.b16 %v767, %v766
    %v773 = vpack.c.b16 %v769, %v768
    %778 = vmatprep.subr.bf16.mxu0 0
    %779 = vmatpush1.bf16.msra.mxu0 0
    %780 = vmatprep.subr.bf16.mxu0 0
    %781 = vmatpush1.bf16.msra.mxu0 0
    %782 = vmatprep.subr.bf16.mxu0 0
    %783 = vmatpush1.bf16.msra.mxu0 0
    %784 = vmatprep.subr.bf16.mxu0 0
    %785 = vmatpush1.bf16.msra.mxu0 0
    %786 = vmatprep.subr.bf16.mxu0 0
    %787 = vmatpush1.bf16.msra.mxu0 %v773
    %788 = vmatprep.subr.bf16.mxu0 0
    %789 = vmatpush1.bf16.msra.mxu0 %v772
    %790 = vmatprep.subr.bf16.mxu0 0
    %791 = vmatpush1.bf16.msra.mxu0 %v771
    %792 = vmatprep.subr.bf16.mxu0 0
    %793 = vmatpush1.bf16.msra.mxu0 %v770
    %794 = vmatprep.subr.bf16.mxu0 0
    %795 = vmatpush2.bf16.msra.mxu0 0
    %796 = vmatprep.subr.bf16.mxu0 0
    %797 = vmatpush2.bf16.msra.mxu0 0
    %798 = vmatprep.subr.bf16.mxu0 0
    %799 = vmatpush2.bf16.msra.mxu0 0
    %800 = vmatprep.subr.bf16.mxu0 0
    %801 = vmatpush2.bf16.msra.mxu0 0
    %802 = vmatprep.subr.bf16.mxu0 0
    %803 = vmatpush2.bf16.msra.mxu0 0
    %804 = vmatprep.subr.bf16.mxu0 0
    %805 = vmatpush2.bf16.msra.mxu0 0
    %806 = vmatprep.subr.bf16.mxu0 0
    %807 = vmatpush2.bf16.msra.mxu0 0
    %808 = vmatprep.subr.bf16.mxu0 0
    %809 = vmatpush2.bf16.msra.mxu0 0
    %810 = vmatprep.mubr.bf16.mxu0 0
    %811 = vmatmul.mubr.bf16.gmra.mxu0 %v191
    %v812 = vpop.f32.mrf.mxu0
    %v813 = vadd.f32 0.0, %v812
    %v814 = vpop.f32.mrf.mxu0
    %v815 = vpop.f32.mrf.mxu0
    %v816 = vadd.f32 0.0, %v815
    %v817 = vpop.f32.mrf.mxu0
    %818 = vdwg.mxu0
    %v827 = vunpack.c.l.b16 %v150
    %v828 = vunpack.c.l.b16 %v151
    %v829 = vunpack.c.l.b16 %v152
    %v830 = vunpack.c.l.b16 %v153
    %v831 = vunpack.c.l.b16 %v154
    %v832 = vunpack.c.l.b16 %v155
    %v833 = vunpack.c.l.b16 %v156
    %v834 = vunpack.c.l.b16 %v157
    %v835 = vpack.c.b16 %v828, %v827
    %v836 = vpack.c.b16 %v830, %v829
    %v837 = vpack.c.b16 %v832, %v831
    %v838 = vpack.c.b16 %v834, %v833
    %843 = vmatprep.subr.bf16.mxu0 0
    %844 = vmatpush1.bf16.msra.mxu0 0
    %845 = vmatprep.subr.bf16.mxu0 0
    %846 = vmatpush1.bf16.msra.mxu0 0
    %847 = vmatprep.subr.bf16.mxu0 0
    %848 = vmatpush1.bf16.msra.mxu0 0
    %849 = vmatprep.subr.bf16.mxu0 0
    %850 = vmatpush1.bf16.msra.mxu0 0
    %851 = vmatprep.subr.bf16.mxu0 0
    %852 = vmatpush1.bf16.msra.mxu0 %v838
    %853 = vmatprep.subr.bf16.mxu0 0
    %854 = vmatpush1.bf16.msra.mxu0 %v837
    %855 = vmatprep.subr.bf16.mxu0 0
    %856 = vmatpush1.bf16.msra.mxu0 %v836
    %857 = vmatprep.subr.bf16.mxu0 0
    %858 = vmatpush1.bf16.msra.mxu0 %v835
    %859 = vmatprep.subr.bf16.mxu0 0
    %860 = vmatpush2.bf16.msra.mxu0 0
    %861 = vmatprep.subr.bf16.mxu0 0
    %862 = vmatpush2.bf16.msra.mxu0 0
    %863 = vmatprep.subr.bf16.mxu0 0
    %864 = vmatpush2.bf16.msra.mxu0 0
    %865 = vmatprep.subr.bf16.mxu0 0
    %866 = vmatpush2.bf16.msra.mxu0 0
    %867 = vmatprep.subr.bf16.mxu0 0
    %868 = vmatpush2.bf16.msra.mxu0 0
    %869 = vmatprep.subr.bf16.mxu0 0
    %870 = vmatpush2.bf16.msra.mxu0 0
    %871 = vmatprep.subr.bf16.mxu0 0
    %872 = vmatpush2.bf16.msra.mxu0 0
    %873 = vmatprep.subr.bf16.mxu0 0
    %874 = vmatpush2.bf16.msra.mxu0 0
    %875 = vmatprep.mubr.bf16.mxu0 0
    %876 = vmatmul.mubr.bf16.gmra.mxu0 %v191
    %v877 = vpop.f32.mrf.mxu0
    %v878 = vadd.f32 0.0, %v877
    %v879 = vpop.f32.mrf.mxu0
    %v880 = vpop.f32.mrf.mxu0
    %v881 = vadd.f32 0.0, %v880
    %v882 = vpop.f32.mrf.mxu0
    %883 = vdwg.mxu0
    %v892 = vunpack.c.l.b16 %v158
    %v893 = vunpack.c.l.b16 %v159
    %v894 = vunpack.c.l.b16 %v160
    %v895 = vunpack.c.l.b16 %v161
    %v896 = vunpack.c.l.b16 %v162
    %v897 = vunpack.c.l.b16 %v163
    %v898 = vunpack.c.l.b16 %v164
    %v899 = vunpack.c.l.b16 %v165
    %v900 = vpack.c.b16 %v893, %v892
    %v901 = vpack.c.b16 %v895, %v894
    %v902 = vpack.c.b16 %v897, %v896
    %v903 = vpack.c.b16 %v899, %v898
    %908 = vmatprep.subr.bf16.mxu0 0
    %909 = vmatpush1.bf16.msra.mxu0 0
    %910 = vmatprep.subr.bf16.mxu0 0
    %911 = vmatpush1.bf16.msra.mxu0 0
    %912 = vmatprep.subr.bf16.mxu0 0
    %913 = vmatpush1.bf16.msra.mxu0 0
    %914 = vmatprep.subr.bf16.mxu0 0
    %915 = vmatpush1.bf16.msra.mxu0 0
    %916 = vmatprep.subr.bf16.mxu0 0
    %917 = vmatpush1.bf16.msra.mxu0 %v903
    %918 = vmatprep.subr.bf16.mxu0 0
    %919 = vmatpush1.bf16.msra.mxu0 %v902
    %920 = vmatprep.subr.bf16.mxu0 0
    %921 = vmatpush1.bf16.msra.mxu0 %v901
    %922 = vmatprep.subr.bf16.mxu0 0
    %923 = vmatpush1.bf16.msra.mxu0 %v900
    %924 = vmatprep.subr.bf16.mxu0 0
    %925 = vmatpush2.bf16.msra.mxu0 0
    %926 = vmatprep.subr.bf16.mxu0 0
    %927 = vmatpush2.bf16.msra.mxu0 0
    %928 = vmatprep.subr.bf16.mxu0 0
    %929 = vmatpush2.bf16.msra.mxu0 0
    %930 = vmatprep.subr.bf16.mxu0 0
    %931 = vmatpush2.bf16.msra.mxu0 0
    %932 = vmatprep.subr.bf16.mxu0 0
    %933 = vmatpush2.bf16.msra.mxu0 0
    %934 = vmatprep.subr.bf16.mxu0 0
    %935 = vmatpush2.bf16.msra.mxu0 0
    %936 = vmatprep.subr.bf16.mxu0 0
    %937 = vmatpush2.bf16.msra.mxu0 0
    %938 = vmatprep.subr.bf16.mxu0 0
    %939 = vmatpush2.bf16.msra.mxu0 0
    %940 = vmatprep.mubr.bf16.mxu0 0
    %941 = vmatmul.mubr.bf16.gmra.mxu0 %v191
    %v942 = vpop.f32.mrf.mxu0
    %v943 = vadd.f32 0.0, %v942
    %v944 = vpop.f32.mrf.mxu0
    %v945 = vpop.f32.mrf.mxu0
    %v946 = vadd.f32 0.0, %v945
    %v947 = vpop.f32.mrf.mxu0
    %948 = vdwg.mxu0
    %v949 = vld [vmem:[%s3] sm:$0xff]
    %v950 = vld [vmem:[%s3 + $0x8] sm:$0xff]
    %vm951 = vcmask 130048
    %v953 = vsel %vm951, %v228, 0
    %v956 = vsel %vm951, %v231, 0
    %v959 = vsel %vm951, %v293, 0
    %v962 = vsel %vm951, %v296, 0
    %v965 = vsel %vm951, %v358, 0
    %v968 = vsel %vm951, %v361, 0
    %v971 = vsel %vm951, %v423, 0
    %v974 = vsel %vm951, %v426, 0
    %v977 = vsel %vm951, %v488, 0
    %v980 = vsel %vm951, %v491, 0
    %v983 = vsel %vm951, %v553, 0
    %v986 = vsel %vm951, %v556, 0
    %v989 = vsel %vm951, %v618, 0
    %v992 = vsel %vm951, %v621, 0
    %v995 = vsel %vm951, %v683, 0
    %v998 = vsel %vm951, %v686, 0
    %1000 = vmatprep.subr.mxu0 0.0
    %1001 = vmatpush1.msra.mxu0 0.0
    %1002 = vmatprep.subr.mxu0 0.0
    %1003 = vmatpush1.msra.mxu0 0.0
    %1004 = vmatprep.subr.mxu0 0.0
    %1005 = vmatpush1.msra.mxu0 0.0
    %1006 = vmatprep.subr.mxu0 0.0
    %1007 = vmatpush1.msra.mxu0 0.0
    %1008 = vmatprep.subr.mxu0 0.0
    %1009 = vmatpush1.msra.mxu0 0.0
    %1010 = vmatprep.subr.mxu0 0.0
    %1011 = vmatpush1.msra.mxu0 0.0
    %1012 = vmatprep.subr.mxu0 0.0
    %1013 = vmatpush1.msra.mxu0 0.0
    %1014 = vmatprep.subr.mxu0 0.0
    %1015 = vmatpush1.msra.mxu0 0.0
    %1016 = vmatprep.subr.mxu0 0.0
    %1017 = vmatpush1.msra.mxu0 0.0
    %1018 = vmatprep.subr.mxu0 0.0
    %1019 = vmatpush1.msra.mxu0 0.0
    %1020 = vmatprep.subr.mxu0 0.0
    %1021 = vmatpush1.msra.mxu0 0.0
    %1022 = vmatprep.subr.mxu0 0.0
    %1023 = vmatpush1.msra.mxu0 0.0
    %1024 = vmatprep.subr.mxu0 0.0
    %1025 = vmatpush1.msra.mxu0 0.0
    %1026 = vmatprep.subr.mxu0 0.0
    %1027 = vmatpush1.msra.mxu0 0.0
    %1028 = vmatprep.subr.mxu0 0.0
    %1029 = vmatpush1.msra.mxu0 %v950
    %1030 = vmatprep.subr.mxu0 0.0
    %1031 = vmatpush1.msra.mxu0 %v949
    %1032 = vmatprep.subr.mxu0 0.0
    %1033 = vmatpush2.msra.mxu0 0.0
    %1034 = vmatprep.subr.mxu0 0.0
    %1035 = vmatpush2.msra.mxu0 0.0
    %1036 = vmatprep.subr.mxu0 0.0
    %1037 = vmatpush2.msra.mxu0 0.0
    %1038 = vmatprep.subr.mxu0 0.0
    %1039 = vmatpush2.msra.mxu0 0.0
    %1040 = vmatprep.subr.mxu0 0.0
    %1041 = vmatpush2.msra.mxu0 0.0
    %1042 = vmatprep.subr.mxu0 0.0
    %1043 = vmatpush2.msra.mxu0 0.0
    %1044 = vmatprep.subr.mxu0 0.0
    %1045 = vmatpush2.msra.mxu0 0.0
    %1046 = vmatprep.subr.mxu0 0.0
    %1047 = vmatpush2.msra.mxu0 0.0
    %1048 = vmatprep.subr.mxu0 0.0
    %1049 = vmatpush2.msra.mxu0 0.0
    %1050 = vmatprep.subr.mxu0 0.0
    %1051 = vmatpush2.msra.mxu0 0.0
    %1052 = vmatprep.subr.mxu0 0.0
    %1053 = vmatpush2.msra.mxu0 0.0
    %1054 = vmatprep.subr.mxu0 0.0
    %1055 = vmatpush2.msra.mxu0 0.0
    %1056 = vmatprep.subr.mxu0 0.0
    %1057 = vmatpush2.msra.mxu0 0.0
    %1058 = vmatprep.subr.mxu0 0.0
    %1059 = vmatpush2.msra.mxu0 0.0
    %1060 = vmatprep.subr.mxu0 0.0
    %1061 = vmatpush2.msra.mxu0 0.0
    %1062 = vmatprep.subr.mxu0 0.0
    %1063 = vmatpush2.msra.mxu0 0.0
    %1064 = vmatprep.mubr.f32.mxu0 0.0
    %1065 = vmatmul.mubr.f32.gmra.mxu0 %v953
    %v1066 = vpop.f32.mrf.mxu0
    %v1067 = vadd.f32 0.0, %v1066
    %v1068 = vpop.f32.mrf.mxu0
    %1069 = vmatprep.mubr.f32.mxu0 0.0
    %1070 = vmatmul.mubr.f32.gmra.mxu0 %v956
    %v1071 = vpop.f32.mrf.mxu0
    %v1072 = vadd.f32 0.0, %v1071
    %v1073 = vpop.f32.mrf.mxu0
    %1074 = vmatprep.mubr.f32.mxu0 0.0
    %1075 = vmatmul.mubr.f32.gmra.mxu0 %v959
    %v1076 = vpop.f32.mrf.mxu0
    %v1077 = vadd.f32 0.0, %v1076
    %v1078 = vpop.f32.mrf.mxu0
    %1079 = vmatprep.mubr.f32.mxu0 0.0
    %1080 = vmatmul.mubr.f32.gmra.mxu0 %v962
    %v1081 = vpop.f32.mrf.mxu0
    %v1082 = vadd.f32 0.0, %v1081
    %v1083 = vpop.f32.mrf.mxu0
    %1084 = vmatprep.mubr.f32.mxu0 0.0
    %1085 = vmatmul.mubr.f32.gmra.mxu0 %v965
    %v1086 = vpop.f32.mrf.mxu0
    %v1087 = vadd.f32 0.0, %v1086
    %v1088 = vpop.f32.mrf.mxu0
    %1089 = vmatprep.mubr.f32.mxu0 0.0
    %1090 = vmatmul.mubr.f32.gmra.mxu0 %v968
    %v1091 = vpop.f32.mrf.mxu0
    %v1092 = vadd.f32 0.0, %v1091
    %v1093 = vpop.f32.mrf.mxu0
    %1094 = vmatprep.mubr.f32.mxu0 0.0
    %1095 = vmatmul.mubr.f32.gmra.mxu0 %v971
    %v1096 = vpop.f32.mrf.mxu0
    %v1097 = vadd.f32 0.0, %v1096
    %v1098 = vpop.f32.mrf.mxu0
    %1099 = vmatprep.mubr.f32.mxu0 0.0
    %1100 = vmatmul.mubr.f32.gmra.mxu0 %v974
    %v1101 = vpop.f32.mrf.mxu0
    %v1102 = vadd.f32 0.0, %v1101
    %v1103 = vpop.f32.mrf.mxu0
    %1104 = vmatprep.mubr.f32.mxu0 0.0
    %1105 = vmatmul.mubr.f32.gmra.mxu0 %v977
    %v1106 = vpop.f32.mrf.mxu0
    %v1107 = vadd.f32 0.0, %v1106
    %v1108 = vpop.f32.mrf.mxu0
    %1109 = vmatprep.mubr.f32.mxu0 0.0
    %1110 = vmatmul.mubr.f32.gmra.mxu0 %v980
    %v1111 = vpop.f32.mrf.mxu0
    %v1112 = vadd.f32 0.0, %v1111
    %v1113 = vpop.f32.mrf.mxu0
    %1114 = vmatprep.mubr.f32.mxu0 0.0
    %1115 = vmatmul.mubr.f32.gmra.mxu0 %v983
    %v1116 = vpop.f32.mrf.mxu0
    %v1117 = vadd.f32 0.0, %v1116
    %v1118 = vpop.f32.mrf.mxu0
    %1119 = vmatprep.mubr.f32.mxu0 0.0
    %1120 = vmatmul.mubr.f32.gmra.mxu0 %v986
    %v1121 = vpop.f32.mrf.mxu0
    %v1122 = vadd.f32 0.0, %v1121
    %v1123 = vpop.f32.mrf.mxu0
    %1124 = vmatprep.mubr.f32.mxu0 0.0
    %1125 = vmatmul.mubr.f32.gmra.mxu0 %v989
    %v1126 = vpop.f32.mrf.mxu0
    %v1127 = vadd.f32 0.0, %v1126
    %v1128 = vpop.f32.mrf.mxu0
    %1129 = vmatprep.mubr.f32.mxu0 0.0
    %1130 = vmatmul.mubr.f32.gmra.mxu0 %v992
    %v1131 = vpop.f32.mrf.mxu0
    %v1132 = vadd.f32 0.0, %v1131
    %v1133 = vpop.f32.mrf.mxu0
    %1134 = vmatprep.mubr.f32.mxu0 0.0
    %1135 = vmatmul.mubr.f32.gmra.mxu0 %v995
    %v1136 = vpop.f32.mrf.mxu0
    %v1137 = vadd.f32 0.0, %v1136
    %v1138 = vpop.f32.mrf.mxu0
    %1139 = vmatprep.mubr.f32.mxu0 0.0
    %1140 = vmatmul.mubr.f32.gmra.mxu0 %v998
    %v1141 = vpop.f32.mrf.mxu0
    %v1142 = vadd.f32 0.0, %v1141
    %v1143 = vpop.f32.mrf.mxu0
    %1144 = vdwg.mxu0
    %v1145 = vld [vmem:[%s1] sm:$0xff]
    %v1146 = vld [vmem:[%s1 + $0x8] sm:$0xff]
    %v1147 = vmul.f32 %v228, %v1145
    %v1148 = vmul.f32 %v231, %v1146
    %v1149 = vmul.f32 %v293, %v1145
    %v1150 = vmul.f32 %v296, %v1146
    %v1151 = vmul.f32 %v358, %v1145
    %v1152 = vmul.f32 %v361, %v1146
    %v1153 = vmul.f32 %v423, %v1145
    %v1154 = vmul.f32 %v426, %v1146
    %v1155 = vmul.f32 %v488, %v1145
    %v1156 = vmul.f32 %v491, %v1146
    %v1157 = vmul.f32 %v553, %v1145
    %v1158 = vmul.f32 %v556, %v1146
    %v1159 = vmul.f32 %v618, %v1145
    %v1160 = vmul.f32 %v621, %v1146
    %v1161 = vmul.f32 %v683, %v1145
    %v1162 = vmul.f32 %v686, %v1146
    %v1163 = vld [vmem:[%s2] sm:$0xff]
    %v1164 = vld [vmem:[%s2 + $0x8] sm:$0xff]
    %v1165 = vmul.f32 %v1067, %v1163
    %v1166 = vmul.f32 %v1072, %v1164
    %v1167 = vmul.f32 %v1077, %v1163
    %v1168 = vmul.f32 %v1082, %v1164
    %v1169 = vmul.f32 %v1087, %v1163
    %v1170 = vmul.f32 %v1092, %v1164
    %v1171 = vmul.f32 %v1097, %v1163
    %v1172 = vmul.f32 %v1102, %v1164
    %v1173 = vmul.f32 %v1107, %v1163
    %v1174 = vmul.f32 %v1112, %v1164
    %v1175 = vmul.f32 %v1117, %v1163
    %v1176 = vmul.f32 %v1122, %v1164
    %v1177 = vmul.f32 %v1127, %v1163
    %v1178 = vmul.f32 %v1132, %v1164
    %v1179 = vmul.f32 %v1137, %v1163
    %v1180 = vmul.f32 %v1142, %v1164
    %v1181 = vadd.f32 %v1147, %v1165
    %v1182 = vadd.f32 %v1148, %v1166
    %v1183 = vadd.f32 %v1149, %v1167
    %v1184 = vadd.f32 %v1150, %v1168
    %v1185 = vadd.f32 %v1151, %v1169
    %v1186 = vadd.f32 %v1152, %v1170
    %v1187 = vadd.f32 %v1153, %v1171
    %v1188 = vadd.f32 %v1154, %v1172
    %v1189 = vadd.f32 %v1155, %v1173
    %v1190 = vadd.f32 %v1156, %v1174
    %v1191 = vadd.f32 %v1157, %v1175
    %v1192 = vadd.f32 %v1158, %v1176
    %v1193 = vadd.f32 %v1159, %v1177
    %v1194 = vadd.f32 %v1160, %v1178
    %v1195 = vadd.f32 %v1161, %v1179
    %v1196 = vadd.f32 %v1162, %v1180
    %v1197 = vpack.c.bf16 %v1182, %v1181
    %v1198 = vpack.c.bf16 %v1184, %v1183
    %v1199 = vpack.c.bf16 %v1186, %v1185
    %v1200 = vpack.c.bf16 %v1188, %v1187
    %v1201 = vpack.c.bf16 %v1190, %v1189
    %v1202 = vpack.c.bf16 %v1192, %v1191
    %v1203 = vpack.c.bf16 %v1194, %v1193
    %v1204 = vpack.c.bf16 %v1196, %v1195
    %v1206 = vsel %vm951, %v1197, 0
    %v1209 = vsel %vm951, %v1201, 0
    %1211 = vmatprep.subr.bf16.mxu0 0
    %1212 = vmatpush1.bf16.xpose.msra.mxu0 0
    %1213 = vmatprep.subr.bf16.mxu0 0
    %1214 = vmatpush1.bf16.xpose.msra.mxu0 0
    %1215 = vmatprep.subr.bf16.mxu0 0
    %1216 = vmatpush1.bf16.xpose.msra.mxu0 0
    %1217 = vmatprep.subr.bf16.mxu0 0
    %1218 = vmatpush1.bf16.xpose.msra.mxu0 0
    %1219 = vmatprep.subr.bf16.mxu0 0
    %1220 = vmatpush1.bf16.xpose.msra.mxu0 0
    %1221 = vmatprep.subr.bf16.mxu0 0
    %1222 = vmatpush1.bf16.xpose.msra.mxu0 0
    %1223 = vmatprep.subr.bf16.mxu0 0
    %1224 = vmatpush1.bf16.xpose.msra.mxu0 0
    %1225 = vmatprep.subr.bf16.mxu0 0
    %1226 = vmatpush1.bf16.xpose.msra.mxu0 %v1209
    %1227 = vmatprep.subr.bf16.mxu0 0
    %1228 = vmatpush2.bf16.xpose.msra.mxu0 0
    %1229 = vmatprep.subr.bf16.mxu0 0
    %1230 = vmatpush2.bf16.xpose.msra.mxu0 0
    %1231 = vmatprep.subr.bf16.mxu0 0
    %1232 = vmatpush2.bf16.xpose.msra.mxu0 0
    %1233 = vmatprep.subr.bf16.mxu0 0
    %1234 = vmatpush2.bf16.xpose.msra.mxu0 0
    %1235 = vmatprep.subr.bf16.mxu0 0
    %1236 = vmatpush2.bf16.xpose.msra.mxu0 0
    %1237 = vmatprep.subr.bf16.mxu0 0
    %1238 = vmatpush2.bf16.xpose.msra.mxu0 0
    %1239 = vmatprep.subr.bf16.mxu0 0
    %1240 = vmatpush2.bf16.xpose.msra.mxu0 0
    %1241 = vmatprep.subr.bf16.mxu0 0
    %1242 = vmatpush2.bf16.xpose.msra.mxu0 0
    %1243 = vmatprep.mubr.bf16.mxu0 0
    %1244 = vmatmul.mubr.bf16.gmra.mxu0 %v1206
    %v1245 = vpop.f32.mrf.mxu0
    %v1246 = vadd.f32 0.0, %v1245
    %v1247 = vpop.f32.mrf.mxu0
    %v1248 = vpop.f32.mrf.mxu0
    %v1249 = vadd.f32 0.0, %v1248
    %v1250 = vpop.f32.mrf.mxu0
    %1251 = vdwg.mxu0
    %v1253 = vsel %vm951, %v1198, 0
    %v1256 = vsel %vm951, %v1202, 0
    %1258 = vmatprep.subr.bf16.mxu0 0
    %1259 = vmatpush1.bf16.xpose.msra.mxu0 0
    %1260 = vmatprep.subr.bf16.mxu0 0
    %1261 = vmatpush1.bf16.xpose.msra.mxu0 0
    %1262 = vmatprep.subr.bf16.mxu0 0
    %1263 = vmatpush1.bf16.xpose.msra.mxu0 0
    %1264 = vmatprep.subr.bf16.mxu0 0
    %1265 = vmatpush1.bf16.xpose.msra.mxu0 0
    %1266 = vmatprep.subr.bf16.mxu0 0
    %1267 = vmatpush1.bf16.xpose.msra.mxu0 0
    %1268 = vmatprep.subr.bf16.mxu0 0
    %1269 = vmatpush1.bf16.xpose.msra.mxu0 0
    %1270 = vmatprep.subr.bf16.mxu0 0
    %1271 = vmatpush1.bf16.xpose.msra.mxu0 0
    %1272 = vmatprep.subr.bf16.mxu0 0
    %1273 = vmatpush1.bf16.xpose.msra.mxu0 %v1256
    %1274 = vmatprep.subr.bf16.mxu0 0
    %1275 = vmatpush2.bf16.xpose.msra.mxu0 0
    %1276 = vmatprep.subr.bf16.mxu0 0
    %1277 = vmatpush2.bf16.xpose.msra.mxu0 0
    %1278 = vmatprep.subr.bf16.mxu0 0
    %1279 = vmatpush2.bf16.xpose.msra.mxu0 0
    %1280 = vmatprep.subr.bf16.mxu0 0
    %1281 = vmatpush2.bf16.xpose.msra.mxu0 0
    %1282 = vmatprep.subr.bf16.mxu0 0
    %1283 = vmatpush2.bf16.xpose.msra.mxu0 0
    %1284 = vmatprep.subr.bf16.mxu0 0
    %1285 = vmatpush2.bf16.xpose.msra.mxu0 0
    %1286 = vmatprep.subr.bf16.mxu0 0
    %1287 = vmatpush2.bf16.xpose.msra.mxu0 0
    %1288 = vmatprep.subr.bf16.mxu0 0
    %1289 = vmatpush2.bf16.xpose.msra.mxu0 0
    %1290 = vmatprep.mubr.bf16.mxu0 0
    %1291 = vmatmul.mubr.bf16.gmra.mxu0 %v1253
    %v1292 = vpop.f32.mrf.mxu0
    %v1293 = vadd.f32 0.0, %v1292
    %v1294 = vpop.f32.mrf.mxu0
    %v1295 = vpop.f32.mrf.mxu0
    %v1296 = vadd.f32 0.0, %v1295
    %v1297 = vpop.f32.mrf.mxu0
    %1298 = vdwg.mxu0
    %v1300 = vsel %vm951, %v1199, 0
    %v1303 = vsel %vm951, %v1203, 0
    %1305 = vmatprep.subr.bf16.mxu0 0
    %1306 = vmatpush1.bf16.xpose.msra.mxu0 0
    %1307 = vmatprep.subr.bf16.mxu0 0
    %1308 = vmatpush1.bf16.xpose.msra.mxu0 0
    %1309 = vmatprep.subr.bf16.mxu0 0
    %1310 = vmatpush1.bf16.xpose.msra.mxu0 0
    %1311 = vmatprep.subr.bf16.mxu0 0
    %1312 = vmatpush1.bf16.xpose.msra.mxu0 0
    %1313 = vmatprep.subr.bf16.mxu0 0
    %1314 = vmatpush1.bf16.xpose.msra.mxu0 0
    %1315 = vmatprep.subr.bf16.mxu0 0
    %1316 = vmatpush1.bf16.xpose.msra.mxu0 0
    %1317 = vmatprep.subr.bf16.mxu0 0
    %1318 = vmatpush1.bf16.xpose.msra.mxu0 0
    %1319 = vmatprep.subr.bf16.mxu0 0
    %1320 = vmatpush1.bf16.xpose.msra.mxu0 %v1303
    %1321 = vmatprep.subr.bf16.mxu0 0
    %1322 = vmatpush2.bf16.xpose.msra.mxu0 0
    %1323 = vmatprep.subr.bf16.mxu0 0
    %1324 = vmatpush2.bf16.xpose.msra.mxu0 0
    %1325 = vmatprep.subr.bf16.mxu0 0
    %1326 = vmatpush2.bf16.xpose.msra.mxu0 0
    %1327 = vmatprep.subr.bf16.mxu0 0
    %1328 = vmatpush2.bf16.xpose.msra.mxu0 0
    %1329 = vmatprep.subr.bf16.mxu0 0
    %1330 = vmatpush2.bf16.xpose.msra.mxu0 0
    %1331 = vmatprep.subr.bf16.mxu0 0
    %1332 = vmatpush2.bf16.xpose.msra.mxu0 0
    %1333 = vmatprep.subr.bf16.mxu0 0
    %1334 = vmatpush2.bf16.xpose.msra.mxu0 0
    %1335 = vmatprep.subr.bf16.mxu0 0
    %1336 = vmatpush2.bf16.xpose.msra.mxu0 0
    %1337 = vmatprep.mubr.bf16.mxu0 0
    %1338 = vmatmul.mubr.bf16.gmra.mxu0 %v1300
    %v1339 = vpop.f32.mrf.mxu0
    %v1340 = vadd.f32 0.0, %v1339
    %v1341 = vpop.f32.mrf.mxu0
    %v1342 = vpop.f32.mrf.mxu0
    %v1343 = vadd.f32 0.0, %v1342
    %v1344 = vpop.f32.mrf.mxu0
    %1345 = vdwg.mxu0
    %v1347 = vsel %vm951, %v1200, 0
    %v1350 = vsel %vm951, %v1204, 0
    %1352 = vmatprep.subr.bf16.mxu0 0
    %1353 = vmatpush1.bf16.xpose.msra.mxu0 0
    %1354 = vmatprep.subr.bf16.mxu0 0
    %1355 = vmatpush1.bf16.xpose.msra.mxu0 0
    %1356 = vmatprep.subr.bf16.mxu0 0
    %1357 = vmatpush1.bf16.xpose.msra.mxu0 0
    %1358 = vmatprep.subr.bf16.mxu0 0
    %1359 = vmatpush1.bf16.xpose.msra.mxu0 0
    %1360 = vmatprep.subr.bf16.mxu0 0
    %1361 = vmatpush1.bf16.xpose.msra.mxu0 0
    %1362 = vmatprep.subr.bf16.mxu0 0
    %1363 = vmatpush1.bf16.xpose.msra.mxu0 0
    %1364 = vmatprep.subr.bf16.mxu0 0
    %1365 = vmatpush1.bf16.xpose.msra.mxu0 0
    %1366 = vmatprep.subr.bf16.mxu0 0
    %1367 = vmatpush1.bf16.xpose.msra.mxu0 %v1350
    %1368 = vmatprep.subr.bf16.mxu0 0
    %1369 = vmatpush2.bf16.xpose.msra.mxu0 0
    %1370 = vmatprep.subr.bf16.mxu0 0
    %1371 = vmatpush2.bf16.xpose.msra.mxu0 0
    %1372 = vmatprep.subr.bf16.mxu0 0
    %1373 = vmatpush2.bf16.xpose.msra.mxu0 0
    %1374 = vmatprep.subr.bf16.mxu0 0
    %1375 = vmatpush2.bf16.xpose.msra.mxu0 0
    %1376 = vmatprep.subr.bf16.mxu0 0
    %1377 = vmatpush2.bf16.xpose.msra.mxu0 0
    %1378 = vmatprep.subr.bf16.mxu0 0
    %1379 = vmatpush2.bf16.xpose.msra.mxu0 0
    %1380 = vmatprep.subr.bf16.mxu0 0
    %1381 = vmatpush2.bf16.xpose.msra.mxu0 0
    %1382 = vmatprep.subr.bf16.mxu0 0
    %1383 = vmatpush2.bf16.xpose.msra.mxu0 0
    %1384 = vmatprep.mubr.bf16.mxu0 0
    %1385 = vmatmul.mubr.bf16.gmra.mxu0 %v1347
    %v1386 = vpop.f32.mrf.mxu0
    %v1387 = vadd.f32 0.0, %v1386
    %v1388 = vpop.f32.mrf.mxu0
    %v1389 = vpop.f32.mrf.mxu0
    %v1390 = vadd.f32 0.0, %v1389
    %v1391 = vpop.f32.mrf.mxu0
    %1392 = vdwg.mxu0
    %v1393 = vmul.f32 %v1246, 0.25
    %v1394 = vmul.f32 %v1249, 0.25
    %v1395 = vmul.f32 %v1293, 0.25
    %v1396 = vmul.f32 %v1296, 0.25
    %v1397 = vmul.f32 %v1340, 0.25
    %v1398 = vmul.f32 %v1343, 0.25
    %v1399 = vmul.f32 %v1387, 0.25
    %v1400 = vmul.f32 %v1390, 0.25
    %v1401 = vld [vmem:[%s4] sm:$0xff]
    %v1402 = vld [vmem:[%s4 + $0x8] sm:$0xff]
    %v1403 = vadd.f32 %v1393, %v1401
    %v1404 = vadd.f32 %v1394, %v1402
    %v1405 = vadd.f32 %v1395, %v1401
    %v1406 = vadd.f32 %v1396, %v1402
    %v1407 = vadd.f32 %v1397, %v1401
    %v1408 = vadd.f32 %v1398, %v1402
    %v1409 = vadd.f32 %v1399, %v1401
    %v1410 = vadd.f32 %v1400, %v1402
    %v1411 = vsel %vm951, %v1403, -inf
    %1412 = vmax.xlane.f32.xlu0 %v1411
    %v1413 = vpop.xlane.xlu0 %1412
    %v1414 = vsel %vm951, %v1404, -inf
    %1415 = vmax.xlane.f32.xlu0 %v1414
    %v1416 = vpop.xlane.xlu0 %1415
    %v1417 = vsel %vm951, %v1405, -inf
    %1418 = vmax.xlane.f32.xlu0 %v1417
    %v1419 = vpop.xlane.xlu0 %1418
    %v1420 = vsel %vm951, %v1406, -inf
    %1421 = vmax.xlane.f32.xlu0 %v1420
    %v1422 = vpop.xlane.xlu0 %1421
    %v1423 = vsel %vm951, %v1407, -inf
    %1424 = vmax.xlane.f32.xlu0 %v1423
    %v1425 = vpop.xlane.xlu0 %1424
    %v1426 = vsel %vm951, %v1408, -inf
    %1427 = vmax.xlane.f32.xlu0 %v1426
    %v1428 = vpop.xlane.xlu0 %1427
    %v1429 = vsel %vm951, %v1409, -inf
    %1430 = vmax.xlane.f32.xlu0 %v1429
    %v1431 = vpop.xlane.xlu0 %1430
    %v1432 = vsel %vm951, %v1410, -inf
    %1433 = vmax.xlane.f32.xlu0 %v1432
    %v1434 = vpop.xlane.xlu0 %1433
    %v1435 = vsub.f32 %v1403, %v1413
    %v1436 = vsub.f32 %v1404, %v1416
    %v1437 = vsub.f32 %v1405, %v1419
    %v1438 = vsub.f32 %v1406, %v1422
    %v1439 = vsub.f32 %v1407, %v1425
    %v1440 = vsub.f32 %v1408, %v1428
    %v1441 = vsub.f32 %v1409, %v1431
    %v1442 = vsub.f32 %v1410, %v1434
    %v1443 = vmul.f32 %v1435, 1.442695
    %v1444 = vpow.pop %v1443
    %v1445 = vmul.f32 %v1436, 1.442695
    %v1446 = vpow.pop %v1445
    %v1447 = vmul.f32 %v1437, 1.442695
    %v1448 = vpow.pop %v1447
    %v1449 = vmul.f32 %v1438, 1.442695
    %v1450 = vpow.pop %v1449
    %v1451 = vmul.f32 %v1439, 1.442695
    %v1452 = vpow.pop %v1451
    %v1453 = vmul.f32 %v1440, 1.442695
    %v1454 = vpow.pop %v1453
    %v1455 = vmul.f32 %v1441, 1.442695
    %v1456 = vpow.pop %v1455
    %v1457 = vmul.f32 %v1442, 1.442695
    %v1458 = vpow.pop %v1457
    %v1459 = vsel %vm951, %v1444, 0.0
    %1460 = vadd.xlane.f32.xlu0 %v1459
    %v1461 = vpop.xlane.xlu0 %1460
    %v1462 = vsel %vm951, %v1446, 0.0
    %1463 = vadd.xlane.f32.xlu0 %v1462
    %v1464 = vpop.xlane.xlu0 %1463
    %v1465 = vsel %vm951, %v1448, 0.0
    %1466 = vadd.xlane.f32.xlu0 %v1465
    %v1467 = vpop.xlane.xlu0 %1466
    %v1468 = vsel %vm951, %v1450, 0.0
    %1469 = vadd.xlane.f32.xlu0 %v1468
    %v1470 = vpop.xlane.xlu0 %1469
    %v1471 = vsel %vm951, %v1452, 0.0
    %1472 = vadd.xlane.f32.xlu0 %v1471
    %v1473 = vpop.xlane.xlu0 %1472
    %v1474 = vsel %vm951, %v1454, 0.0
    %1475 = vadd.xlane.f32.xlu0 %v1474
    %v1476 = vpop.xlane.xlu0 %1475
    %v1477 = vsel %vm951, %v1456, 0.0
    %1478 = vadd.xlane.f32.xlu0 %v1477
    %v1479 = vpop.xlane.xlu0 %1478
    %v1480 = vsel %vm951, %v1458, 0.0
    %1481 = vadd.xlane.f32.xlu0 %v1480
    %v1482 = vpop.xlane.xlu0 %1481
    %v1483 = vrcp.pop %v1461
    %v1484 = vrcp.pop %v1464
    %v1485 = vrcp.pop %v1467
    %v1486 = vrcp.pop %v1470
    %v1487 = vrcp.pop %v1473
    %v1488 = vrcp.pop %v1476
    %v1489 = vrcp.pop %v1479
    %v1490 = vrcp.pop %v1482
    %v1491 = vmul.f32 %v1444, %v1483
    %v1492 = vmul.f32 %v1446, %v1484
    %v1493 = vmul.f32 %v1448, %v1485
    %v1494 = vmul.f32 %v1450, %v1486
    %v1495 = vmul.f32 %v1452, %v1487
    %v1496 = vmul.f32 %v1454, %v1488
    %v1497 = vmul.f32 %v1456, %v1489
    %v1498 = vmul.f32 %v1458, %v1490
    %v1499 = vpack.c.bf16 %v1492, %v1491
    %v1500 = vpack.c.bf16 %v1494, %v1493
    %v1501 = vpack.c.bf16 %v1496, %v1495
    %v1502 = vpack.c.bf16 %v1498, %v1497
    %v1503 = vpack.c.bf16 %v751, %v748
    %v1504 = vpack.c.bf16 %v816, %v813
    %v1505 = vpack.c.bf16 %v881, %v878
    %v1506 = vpack.c.bf16 %v946, %v943
    %v1508 = vsel %vm951, %v1499, 0
    %1510 = vmatprep.subr.bf16.mxu0 0
    %1511 = vmatpush1.bf16.msra.mxu0 0
    %1512 = vmatprep.subr.bf16.mxu0 0
    %1513 = vmatpush1.bf16.msra.mxu0 0
    %1514 = vmatprep.subr.bf16.mxu0 0
    %1515 = vmatpush1.bf16.msra.mxu0 0
    %1516 = vmatprep.subr.bf16.mxu0 0
    %1517 = vmatpush1.bf16.msra.mxu0 0
    %1518 = vmatprep.subr.bf16.mxu0 0
    %1519 = vmatpush1.bf16.msra.mxu0 0
    %1520 = vmatprep.subr.bf16.mxu0 0
    %1521 = vmatpush1.bf16.msra.mxu0 0
    %1522 = vmatprep.subr.bf16.mxu0 0
    %1523 = vmatpush1.bf16.msra.mxu0 0
    %1524 = vmatprep.subr.bf16.mxu0 0
    %1525 = vmatpush1.bf16.msra.mxu0 %v1503
    %1526 = vmatprep.subr.bf16.mxu0 0
    %1527 = vmatpush2.bf16.msra.mxu0 0
    %1528 = vmatprep.subr.bf16.mxu0 0
    %1529 = vmatpush2.bf16.msra.mxu0 0
    %1530 = vmatprep.subr.bf16.mxu0 0
    %1531 = vmatpush2.bf16.msra.mxu0 0
    %1532 = vmatprep.subr.bf16.mxu0 0
    %1533 = vmatpush2.bf16.msra.mxu0 0
    %1534 = vmatprep.subr.bf16.mxu0 0
    %1535 = vmatpush2.bf16.msra.mxu0 0
    %1536 = vmatprep.subr.bf16.mxu0 0
    %1537 = vmatpush2.bf16.msra.mxu0 0
    %1538 = vmatprep.subr.bf16.mxu0 0
    %1539 = vmatpush2.bf16.msra.mxu0 0
    %1540 = vmatprep.subr.bf16.mxu0 0
    %1541 = vmatpush2.bf16.msra.mxu0 0
    %1542 = vmatprep.mubr.bf16.mxu0 0
    %1543 = vmatmul.mubr.bf16.gmra.mxu0 %v1508
    %v1544 = vpop.f32.mrf.mxu0
    %v1545 = vadd.f32 0.0, %v1544
    %v1546 = vpop.f32.mrf.mxu0
    %v1547 = vpop.f32.mrf.mxu0
    %v1548 = vadd.f32 0.0, %v1547
    %v1549 = vpop.f32.mrf.mxu0
    %1550 = vdwg.mxu0
    %v1552 = vsel %vm951, %v1500, 0
    %1554 = vmatprep.subr.bf16.mxu0 0
    %1555 = vmatpush1.bf16.msra.mxu0 0
    %1556 = vmatprep.subr.bf16.mxu0 0
    %1557 = vmatpush1.bf16.msra.mxu0 0
    %1558 = vmatprep.subr.bf16.mxu0 0
    %1559 = vmatpush1.bf16.msra.mxu0 0
    %1560 = vmatprep.subr.bf16.mxu0 0
    %1561 = vmatpush1.bf16.msra.mxu0 0
    %1562 = vmatprep.subr.bf16.mxu0 0
    %1563 = vmatpush1.bf16.msra.mxu0 0
    %1564 = vmatprep.subr.bf16.mxu0 0
    %1565 = vmatpush1.bf16.msra.mxu0 0
    %1566 = vmatprep.subr.bf16.mxu0 0
    %1567 = vmatpush1.bf16.msra.mxu0 0
    %1568 = vmatprep.subr.bf16.mxu0 0
    %1569 = vmatpush1.bf16.msra.mxu0 %v1504
    %1570 = vmatprep.subr.bf16.mxu0 0
    %1571 = vmatpush2.bf16.msra.mxu0 0
    %1572 = vmatprep.subr.bf16.mxu0 0
    %1573 = vmatpush2.bf16.msra.mxu0 0
    %1574 = vmatprep.subr.bf16.mxu0 0
    %1575 = vmatpush2.bf16.msra.mxu0 0
    %1576 = vmatprep.subr.bf16.mxu0 0
    %1577 = vmatpush2.bf16.msra.mxu0 0
    %1578 = vmatprep.subr.bf16.mxu0 0
    %1579 = vmatpush2.bf16.msra.mxu0 0
    %1580 = vmatprep.subr.bf16.mxu0 0
    %1581 = vmatpush2.bf16.msra.mxu0 0
    %1582 = vmatprep.subr.bf16.mxu0 0
    %1583 = vmatpush2.bf16.msra.mxu0 0
    %1584 = vmatprep.subr.bf16.mxu0 0
    %1585 = vmatpush2.bf16.msra.mxu0 0
    %1586 = vmatprep.mubr.bf16.mxu0 0
    %1587 = vmatmul.mubr.bf16.gmra.mxu0 %v1552
    %v1588 = vpop.f32.mrf.mxu0
    %v1589 = vadd.f32 0.0, %v1588
    %v1590 = vpop.f32.mrf.mxu0
    %v1591 = vpop.f32.mrf.mxu0
    %v1592 = vadd.f32 0.0, %v1591
    %v1593 = vpop.f32.mrf.mxu0
    %1594 = vdwg.mxu0
    %v1596 = vsel %vm951, %v1501, 0
    %1598 = vmatprep.subr.bf16.mxu0 0
    %1599 = vmatpush1.bf16.msra.mxu0 0
    %1600 = vmatprep.subr.bf16.mxu0 0
    %1601 = vmatpush1.bf16.msra.mxu0 0
    %1602 = vmatprep.subr.bf16.mxu0 0
    %1603 = vmatpush1.bf16.msra.mxu0 0
    %1604 = vmatprep.subr.bf16.mxu0 0
    %1605 = vmatpush1.bf16.msra.mxu0 0
    %1606 = vmatprep.subr.bf16.mxu0 0
    %1607 = vmatpush1.bf16.msra.mxu0 0
    %1608 = vmatprep.subr.bf16.mxu0 0
    %1609 = vmatpush1.bf16.msra.mxu0 0
    %1610 = vmatprep.subr.bf16.mxu0 0
    %1611 = vmatpush1.bf16.msra.mxu0 0
    %1612 = vmatprep.subr.bf16.mxu0 0
    %1613 = vmatpush1.bf16.msra.mxu0 %v1505
    %1614 = vmatprep.subr.bf16.mxu0 0
    %1615 = vmatpush2.bf16.msra.mxu0 0
    %1616 = vmatprep.subr.bf16.mxu0 0
    %1617 = vmatpush2.bf16.msra.mxu0 0
    %1618 = vmatprep.subr.bf16.mxu0 0
    %1619 = vmatpush2.bf16.msra.mxu0 0
    %1620 = vmatprep.subr.bf16.mxu0 0
    %1621 = vmatpush2.bf16.msra.mxu0 0
    %1622 = vmatprep.subr.bf16.mxu0 0
    %1623 = vmatpush2.bf16.msra.mxu0 0
    %1624 = vmatprep.subr.bf16.mxu0 0
    %1625 = vmatpush2.bf16.msra.mxu0 0
    %1626 = vmatprep.subr.bf16.mxu0 0
    %1627 = vmatpush2.bf16.msra.mxu0 0
    %1628 = vmatprep.subr.bf16.mxu0 0
    %1629 = vmatpush2.bf16.msra.mxu0 0
    %1630 = vmatprep.mubr.bf16.mxu0 0
    %1631 = vmatmul.mubr.bf16.gmra.mxu0 %v1596
    %v1632 = vpop.f32.mrf.mxu0
    %v1633 = vadd.f32 0.0, %v1632
    %v1634 = vpop.f32.mrf.mxu0
    %v1635 = vpop.f32.mrf.mxu0
    %v1636 = vadd.f32 0.0, %v1635
    %v1637 = vpop.f32.mrf.mxu0
    %1638 = vdwg.mxu0
    %v1640 = vsel %vm951, %v1502, 0
    %1642 = vmatprep.subr.bf16.mxu0 0
    %1643 = vmatpush1.bf16.msra.mxu0 0
    %1644 = vmatprep.subr.bf16.mxu0 0
    %1645 = vmatpush1.bf16.msra.mxu0 0
    %1646 = vmatprep.subr.bf16.mxu0 0
    %1647 = vmatpush1.bf16.msra.mxu0 0
    %1648 = vmatprep.subr.bf16.mxu0 0
    %1649 = vmatpush1.bf16.msra.mxu0 0
    %1650 = vmatprep.subr.bf16.mxu0 0
    %1651 = vmatpush1.bf16.msra.mxu0 0
    %1652 = vmatprep.subr.bf16.mxu0 0
    %1653 = vmatpush1.bf16.msra.mxu0 0
    %1654 = vmatprep.subr.bf16.mxu0 0
    %1655 = vmatpush1.bf16.msra.mxu0 0
    %1656 = vmatprep.subr.bf16.mxu0 0
    %1657 = vmatpush1.bf16.msra.mxu0 %v1506
    %1658 = vmatprep.subr.bf16.mxu0 0
    %1659 = vmatpush2.bf16.msra.mxu0 0
    %1660 = vmatprep.subr.bf16.mxu0 0
    %1661 = vmatpush2.bf16.msra.mxu0 0
    %1662 = vmatprep.subr.bf16.mxu0 0
    %1663 = vmatpush2.bf16.msra.mxu0 0
    %1664 = vmatprep.subr.bf16.mxu0 0
    %1665 = vmatpush2.bf16.msra.mxu0 0
    %1666 = vmatprep.subr.bf16.mxu0 0
    %1667 = vmatpush2.bf16.msra.mxu0 0
    %1668 = vmatprep.subr.bf16.mxu0 0
    %1669 = vmatpush2.bf16.msra.mxu0 0
    %1670 = vmatprep.subr.bf16.mxu0 0
    %1671 = vmatpush2.bf16.msra.mxu0 0
    %1672 = vmatprep.subr.bf16.mxu0 0
    %1673 = vmatpush2.bf16.msra.mxu0 0
    %1674 = vmatprep.mubr.bf16.mxu0 0
    %1675 = vmatmul.mubr.bf16.gmra.mxu0 %v1640
    %v1676 = vpop.f32.mrf.mxu0
    %v1677 = vadd.f32 0.0, %v1676
    %v1678 = vpop.f32.mrf.mxu0
    %v1679 = vpop.f32.mrf.mxu0
    %v1680 = vadd.f32 0.0, %v1679
    %v1681 = vpop.f32.mrf.mxu0
    %1682 = vdwg.mxu0
    %v1683 = vpack.c.bf16 %v1548, %v1545
    %v1684 = vpack.c.bf16 %v1592, %v1589
    %v1685 = vpack.c.bf16 %v1636, %v1633
    %v1686 = vpack.c.bf16 %v1680, %v1677
    %v1687 = vld [vmem:[%s7] sm:$0xf]
    %v1688 = vld [vmem:[%s7 + $0x4] sm:$0xf]
    %v1689 = vld [vmem:[%s7 + $0x8] sm:$0xf]
    %v1690 = vld [vmem:[%s7 + $0xc] sm:$0xf]
    %v1691 = vld [vmem:[%s7 + $0x10] sm:$0xf]
    %v1692 = vld [vmem:[%s7 + $0x14] sm:$0xf]
    %v1693 = vld [vmem:[%s7 + $0x18] sm:$0xf]
    %v1694 = vld [vmem:[%s7 + $0x1c] sm:$0xf]
    %v1697 = vunpack.c.l.b16 %v1687
    %v1698 = vunpack.c.l.b16 %v1688
    %v1699 = vpack.c.b16 %v1698, %v1697
    %v1702 = vsel %vm951, %v1683, 0
    %1704 = vmatprep.subr.bf16.mxu0 0
    %1705 = vmatpush1.bf16.msra.mxu0 0
    %1706 = vmatprep.subr.bf16.mxu0 0
    %1707 = vmatpush1.bf16.msra.mxu0 0
    %1708 = vmatprep.subr.bf16.mxu0 0
    %1709 = vmatpush1.bf16.msra.mxu0 0
    %1710 = vmatprep.subr.bf16.mxu0 0
    %1711 = vmatpush1.bf16.msra.mxu0 0
    %1712 = vmatprep.subr.bf16.mxu0 0
    %1713 = vmatpush1.bf16.msra.mxu0 0
    %1714 = vmatprep.subr.bf16.mxu0 0
    %1715 = vmatpush1.bf16.msra.mxu0 0
    %1716 = vmatprep.subr.bf16.mxu0 0
    %1717 = vmatpush1.bf16.msra.mxu0 0
    %1718 = vmatprep.subr.bf16.mxu0 0
    %1719 = vmatpush1.bf16.msra.mxu0 %v1699
    %1720 = vmatprep.subr.bf16.mxu0 0
    %1721 = vmatpush2.bf16.msra.mxu0 0
    %1722 = vmatprep.subr.bf16.mxu0 0
    %1723 = vmatpush2.bf16.msra.mxu0 0
    %1724 = vmatprep.subr.bf16.mxu0 0
    %1725 = vmatpush2.bf16.msra.mxu0 0
    %1726 = vmatprep.subr.bf16.mxu0 0
    %1727 = vmatpush2.bf16.msra.mxu0 0
    %1728 = vmatprep.subr.bf16.mxu0 0
    %1729 = vmatpush2.bf16.msra.mxu0 0
    %1730 = vmatprep.subr.bf16.mxu0 0
    %1731 = vmatpush2.bf16.msra.mxu0 0
    %1732 = vmatprep.subr.bf16.mxu0 0
    %1733 = vmatpush2.bf16.msra.mxu0 0
    %1734 = vmatprep.subr.bf16.mxu0 0
    %1735 = vmatpush2.bf16.msra.mxu0 0
    %1736 = vmatprep.mubr.bf16.mxu0 0
    %1737 = vmatmul.mubr.bf16.gmra.mxu0 %v1702
    %v1738 = vpop.f32.mrf.mxu0
    %v1739 = vadd.f32 0.0, %v1738
    %v1740 = vpop.f32.mrf.mxu0
    %v1741 = vpop.f32.mrf.mxu0
    %v1742 = vadd.f32 0.0, %v1741
    %v1743 = vpop.f32.mrf.mxu0
    %1744 = vdwg.mxu0
    %v1747 = vunpack.c.l.b16 %v1689
    %v1748 = vunpack.c.l.b16 %v1690
    %v1749 = vpack.c.b16 %v1748, %v1747
    %v1752 = vsel %vm951, %v1684, 0
    %1754 = vmatprep.subr.bf16.mxu0 0
    %1755 = vmatpush1.bf16.msra.mxu0 0
    %1756 = vmatprep.subr.bf16.mxu0 0
    %1757 = vmatpush1.bf16.msra.mxu0 0
    %1758 = vmatprep.subr.bf16.mxu0 0
    %1759 = vmatpush1.bf16.msra.mxu0 0
    %1760 = vmatprep.subr.bf16.mxu0 0
    %1761 = vmatpush1.bf16.msra.mxu0 0
    %1762 = vmatprep.subr.bf16.mxu0 0
    %1763 = vmatpush1.bf16.msra.mxu0 0
    %1764 = vmatprep.subr.bf16.mxu0 0
    %1765 = vmatpush1.bf16.msra.mxu0 0
    %1766 = vmatprep.subr.bf16.mxu0 0
    %1767 = vmatpush1.bf16.msra.mxu0 0
    %1768 = vmatprep.subr.bf16.mxu0 0
    %1769 = vmatpush1.bf16.msra.mxu0 %v1749
    %1770 = vmatprep.subr.bf16.mxu0 0
    %1771 = vmatpush2.bf16.msra.mxu0 0
    %1772 = vmatprep.subr.bf16.mxu0 0
    %1773 = vmatpush2.bf16.msra.mxu0 0
    %1774 = vmatprep.subr.bf16.mxu0 0
    %1775 = vmatpush2.bf16.msra.mxu0 0
    %1776 = vmatprep.subr.bf16.mxu0 0
    %1777 = vmatpush2.bf16.msra.mxu0 0
    %1778 = vmatprep.subr.bf16.mxu0 0
    %1779 = vmatpush2.bf16.msra.mxu0 0
    %1780 = vmatprep.subr.bf16.mxu0 0
    %1781 = vmatpush2.bf16.msra.mxu0 0
    %1782 = vmatprep.subr.bf16.mxu0 0
    %1783 = vmatpush2.bf16.msra.mxu0 0
    %1784 = vmatprep.subr.bf16.mxu0 0
    %1785 = vmatpush2.bf16.msra.mxu0 0
    %1786 = vmatprep.mubr.bf16.mxu0 0
    %1787 = vmatmul.mubr.bf16.gmra.mxu0 %v1752
    %v1788 = vpop.f32.mrf.mxu0
    %v1789 = vadd.f32 0.0, %v1788
    %v1790 = vpop.f32.mrf.mxu0
    %v1791 = vpop.f32.mrf.mxu0
    %v1792 = vadd.f32 0.0, %v1791
    %v1793 = vpop.f32.mrf.mxu0
    %1794 = vdwg.mxu0
    %v1797 = vunpack.c.l.b16 %v1691
    %v1798 = vunpack.c.l.b16 %v1692
    %v1799 = vpack.c.b16 %v1798, %v1797
    %v1802 = vsel %vm951, %v1685, 0
    %1804 = vmatprep.subr.bf16.mxu0 0
    %1805 = vmatpush1.bf16.msra.mxu0 0
    %1806 = vmatprep.subr.bf16.mxu0 0
    %1807 = vmatpush1.bf16.msra.mxu0 0
    %1808 = vmatprep.subr.bf16.mxu0 0
    %1809 = vmatpush1.bf16.msra.mxu0 0
    %1810 = vmatprep.subr.bf16.mxu0 0
    %1811 = vmatpush1.bf16.msra.mxu0 0
    %1812 = vmatprep.subr.bf16.mxu0 0
    %1813 = vmatpush1.bf16.msra.mxu0 0
    %1814 = vmatprep.subr.bf16.mxu0 0
    %1815 = vmatpush1.bf16.msra.mxu0 0
    %1816 = vmatprep.subr.bf16.mxu0 0
    %1817 = vmatpush1.bf16.msra.mxu0 0
    %1818 = vmatprep.subr.bf16.mxu0 0
    %1819 = vmatpush1.bf16.msra.mxu0 %v1799
    %1820 = vmatprep.subr.bf16.mxu0 0
    %1821 = vmatpush2.bf16.msra.mxu0 0
    %1822 = vmatprep.subr.bf16.mxu0 0
    %1823 = vmatpush2.bf16.msra.mxu0 0
    %1824 = vmatprep.subr.bf16.mxu0 0
    %1825 = vmatpush2.bf16.msra.mxu0 0
    %1826 = vmatprep.subr.bf16.mxu0 0
    %1827 = vmatpush2.bf16.msra.mxu0 0
    %1828 = vmatprep.subr.bf16.mxu0 0
    %1829 = vmatpush2.bf16.msra.mxu0 0
    %1830 = vmatprep.subr.bf16.mxu0 0
    %1831 = vmatpush2.bf16.msra.mxu0 0
    %1832 = vmatprep.subr.bf16.mxu0 0
    %1833 = vmatpush2.bf16.msra.mxu0 0
    %1834 = vmatprep.subr.bf16.mxu0 0
    %1835 = vmatpush2.bf16.msra.mxu0 0
    %1836 = vmatprep.mubr.bf16.mxu0 0
    %1837 = vmatmul.mubr.bf16.gmra.mxu0 %v1802
    %v1838 = vpop.f32.mrf.mxu0
    %v1839 = vadd.f32 0.0, %v1838
    %v1840 = vpop.f32.mrf.mxu0
    %v1841 = vpop.f32.mrf.mxu0
    %v1842 = vadd.f32 0.0, %v1841
    %v1843 = vpop.f32.mrf.mxu0
    %1844 = vdwg.mxu0
    %v1847 = vunpack.c.l.b16 %v1693
    %v1848 = vunpack.c.l.b16 %v1694
    %v1849 = vpack.c.b16 %v1848, %v1847
    %v1852 = vsel %vm951, %v1686, 0
    %1854 = vmatprep.subr.bf16.mxu0 0
    %1855 = vmatpush1.bf16.msra.mxu0 0
    %1856 = vmatprep.subr.bf16.mxu0 0
    %1857 = vmatpush1.bf16.msra.mxu0 0
    %1858 = vmatprep.subr.bf16.mxu0 0
    %1859 = vmatpush1.bf16.msra.mxu0 0
    %1860 = vmatprep.subr.bf16.mxu0 0
    %1861 = vmatpush1.bf16.msra.mxu0 0
    %1862 = vmatprep.subr.bf16.mxu0 0
    %1863 = vmatpush1.bf16.msra.mxu0 0
    %1864 = vmatprep.subr.bf16.mxu0 0
    %1865 = vmatpush1.bf16.msra.mxu0 0
    %1866 = vmatprep.subr.bf16.mxu0 0
    %1867 = vmatpush1.bf16.msra.mxu0 0
    %1868 = vmatprep.subr.bf16.mxu0 0
    %1869 = vmatpush1.bf16.msra.mxu0 %v1849
    %1870 = vmatprep.subr.bf16.mxu0 0
    %1871 = vmatpush2.bf16.msra.mxu0 0
    %1872 = vmatprep.subr.bf16.mxu0 0
    %1873 = vmatpush2.bf16.msra.mxu0 0
    %1874 = vmatprep.subr.bf16.mxu0 0
    %1875 = vmatpush2.bf16.msra.mxu0 0
    %1876 = vmatprep.subr.bf16.mxu0 0
    %1877 = vmatpush2.bf16.msra.mxu0 0
    %1878 = vmatprep.subr.bf16.mxu0 0
    %1879 = vmatpush2.bf16.msra.mxu0 0
    %1880 = vmatprep.subr.bf16.mxu0 0
    %1881 = vmatpush2.bf16.msra.mxu0 0
    %1882 = vmatprep.subr.bf16.mxu0 0
    %1883 = vmatpush2.bf16.msra.mxu0 0
    %1884 = vmatprep.subr.bf16.mxu0 0
    %1885 = vmatpush2.bf16.msra.mxu0 0
    %1886 = vmatprep.mubr.bf16.mxu0 0
    %1887 = vmatmul.mubr.bf16.gmra.mxu0 %v1852
    %v1888 = vpop.f32.mrf.mxu0
    %v1889 = vadd.f32 0.0, %v1888
    %v1890 = vpop.f32.mrf.mxu0
    %v1891 = vpop.f32.mrf.mxu0
    %v1892 = vadd.f32 0.0, %v1891
    %v1893 = vpop.f32.mrf.mxu0
    %1894 = vdwg.mxu0
    %v1895 = vsel %vm44, %v1739, 0.0
    %v1896 = vsel %vm44, %v1789, 0.0
    %v1897 = vadd.f32 %v1895, %v1896
    %v1898 = vsel %vm44, %v1839, 0.0
    %v1899 = vadd.f32 %v1897, %v1898
    %v1900 = vsel %vm44, %v1889, 0.0
    %v1901 = vadd.f32 %v1899, %v1900
    %v1902 = vsel %vm44, %v1742, 0.0
    %v1903 = vsel %vm44, %v1792, 0.0
    %v1904 = vadd.f32 %v1902, %v1903
    %v1905 = vsel %vm44, %v1842, 0.0
    %v1906 = vadd.f32 %v1904, %v1905
    %v1907 = vsel %vm44, %v1892, 0.0
    %v1908 = vadd.f32 %v1906, %v1907
    %v1909 = vadd.f32 %v40, %v1901
    %v1910 = vadd.f32 %v41, %v1908
    %v1911 = vmul.f32 %v1909, %v1909
    %v1912 = vmul.f32 %v1910, %v1910
    %v1913 = vsel %vm44, %v1911, 0.0
    %1914 = vadd.xlane.f32.xlu0 %v1913
    %v1915 = vpop.xlane.xlu0 %1914
    %v1916 = vsel %vm44, %v1912, 0.0
    %1917 = vadd.xlane.f32.xlu0 %v1916
    %v1918 = vpop.xlane.xlu0 %1917
    %v1919 = vmul.f32 %v1915, %v51
    %v1920 = vmul.f32 %v1918, %v51
    %v1921 = vadd.f32 %v1919, 1e-05
    %v1922 = vadd.f32 %v1920, 1e-05
    %v1923 = vrsqrt.pop %v1921
    %v1924 = vrsqrt.pop %v1922
    %v1925 = vmul.f32 %v1909, %v1923
    %v1926 = vmul.f32 %v1910, %v1924
    %v1927 = vld [vmem:[%s8] sm:$0x1]
    %v1929 = vlaneseq
    %v1930 = vshrl.u32 %v1929, 7
    %v1931 = vsub.s32 0, %v1930
    %v1932 = vrot.slane %v1927, %v1931
    %v1934 = vmul.f32 %v1925, %v1932
    %v1935 = vmul.f32 %v1926, %v1932
    %v1936 = vpack.c.bf16 %v1935, %v1934
    %v1937 = vld [vmem:[%s9] sm:$0xff]
    %v1938 = vld [vmem:[%s9 + $0x8] sm:$0xff]
    %v1939 = vld [vmem:[%s9 + $0x10] sm:$0xff]
    %v1940 = vld [vmem:[%s9 + $0x18] sm:$0xff]
    %v1941 = vld [vmem:[%s9 + $0x20] sm:$0xff]
    %v1942 = vld [vmem:[%s9 + $0x28] sm:$0xff]
    %v1943 = vld [vmem:[%s9 + $0x30] sm:$0xff]
    %v1944 = vld [vmem:[%s9 + $0x38] sm:$0xff]
    %v1953 = vunpack.c.l.b16 %v1937
    %v1954 = vunpack.c.h.b16 %v1937
    %v1955 = vunpack.c.l.b16 %v1938
    %v1956 = vunpack.c.h.b16 %v1938
    %v1957 = vunpack.c.l.b16 %v1939
    %v1958 = vunpack.c.h.b16 %v1939
    %v1959 = vunpack.c.l.b16 %v1940
    %v1960 = vunpack.c.h.b16 %v1940
    %v1961 = vunpack.c.l.b16 %v1941
    %v1962 = vunpack.c.h.b16 %v1941
    %v1963 = vunpack.c.l.b16 %v1942
    %v1964 = vunpack.c.h.b16 %v1942
    %v1965 = vunpack.c.l.b16 %v1943
    %v1966 = vunpack.c.h.b16 %v1943
    %v1967 = vunpack.c.l.b16 %v1944
    %v1968 = vunpack.c.h.b16 %v1944
    %v1969 = vpack.c.b16 %v1955, %v1953
    %v1970 = vpack.c.b16 %v1956, %v1954
    %v1971 = vpack.c.b16 %v1959, %v1957
    %v1972 = vpack.c.b16 %v1960, %v1958
    %v1973 = vpack.c.b16 %v1963, %v1961
    %v1974 = vpack.c.b16 %v1964, %v1962
    %v1975 = vpack.c.b16 %v1967, %v1965
    %v1976 = vpack.c.b16 %v1968, %v1966
    %v1986 = vsel %vm44, %v1936, 0
    %1988 = vmatprep.subr.bf16.mxu0 0
    %1989 = vmatpush1.bf16.msra.mxu0 0
    %1990 = vmatprep.subr.bf16.mxu0 0
    %1991 = vmatpush1.bf16.msra.mxu0 0
    %1992 = vmatprep.subr.bf16.mxu0 0
    %1993 = vmatpush1.bf16.msra.mxu0 0
    %1994 = vmatprep.subr.bf16.mxu0 0
    %1995 = vmatpush1.bf16.msra.mxu0 0
    %1996 = vmatprep.subr.bf16.mxu0 %v1976
    %1997 = vmatpush1.bf16.msra.mxu0 %v1975
    %1998 = vmatprep.subr.bf16.mxu0 %v1974
    %1999 = vmatpush1.bf16.msra.mxu0 %v1973
    %2000 = vmatprep.subr.bf16.mxu0 %v1972
    %2001 = vmatpush1.bf16.msra.mxu0 %v1971
    %2002 = vmatprep.subr.bf16.mxu0 %v1970
    %2003 = vmatpush1.bf16.msra.mxu0 %v1969
    %2004 = vmatprep.subr.bf16.mxu0 0
    %2005 = vmatpush2.bf16.msra.mxu0 0
    %2006 = vmatprep.subr.bf16.mxu0 0
    %2007 = vmatpush2.bf16.msra.mxu0 0
    %2008 = vmatprep.subr.bf16.mxu0 0
    %2009 = vmatpush2.bf16.msra.mxu0 0
    %2010 = vmatprep.subr.bf16.mxu0 0
    %2011 = vmatpush2.bf16.msra.mxu0 0
    %2012 = vmatprep.subr.bf16.mxu0 0
    %2013 = vmatpush2.bf16.msra.mxu0 0
    %2014 = vmatprep.subr.bf16.mxu0 0
    %2015 = vmatpush2.bf16.msra.mxu0 0
    %2016 = vmatprep.subr.bf16.mxu0 0
    %2017 = vmatpush2.bf16.msra.mxu0 0
    %2018 = vmatprep.subr.bf16.mxu0 0
    %2019 = vmatpush2.bf16.msra.mxu0 0
    %2020 = vmatprep.mubr.bf16.mxu0 0
    %2021 = vmatmul.mubr.bf16.gmra.mxu0 %v1986
    %v2022 = vpop.f32.mrf.mxu0
    %v2023 = vadd.f32 0.0, %v2022
    %v2024 = vpop.f32.mrf.mxu0
    %v2025 = vadd.f32 0.0, %v2024
    %v2026 = vpop.f32.mrf.mxu0
    %v2027 = vadd.f32 0.0, %v2026
    %v2028 = vpop.f32.mrf.mxu0
    %v2029 = vadd.f32 0.0, %v2028
    %2030 = vdwg.mxu0
    %v2031 = vxor.u32 %v2023, 2147483648
    %v2032 = vxor.u32 %v2027, 2147483648
    %v2033 = vmul.f32 %v2031, 1.442695
    %v2034 = vpow.pop %v2033
    %v2035 = vmul.f32 %v2032, 1.442695
    %v2036 = vpow.pop %v2035
    %v2037 = vadd.f32 %v2034, 1.0
    %v2038 = vadd.f32 %v2036, 1.0
    %v2039 = vrcp.pop %v2037
    %v2040 = vmul.f32 1.0, %v2039
    %v2041 = vrcp.pop %v2038
    %v2042 = vmul.f32 1.0, %v2041
    %v2043 = vmul.f32 %v2023, %v2040
    %v2044 = vmul.f32 %v2027, %v2042
    %v2045 = vmul.f32 %v2025, %v2043
    %v2046 = vmul.f32 %v2029, %v2044
    %v2047 = vpack.c.bf16 %v2046, %v2045
    %v2048 = vld [vmem:[%s10] sm:$0xf]
    %v2049 = vld [vmem:[%s10 + $0x4] sm:$0xf]
    %v2050 = vld [vmem:[%s10 + $0x8] sm:$0xf]
    %v2051 = vld [vmem:[%s10 + $0xc] sm:$0xf]
    %v2052 = vld [vmem:[%s10 + $0x10] sm:$0xf]
    %v2053 = vld [vmem:[%s10 + $0x14] sm:$0xf]
    %v2054 = vld [vmem:[%s10 + $0x18] sm:$0xf]
    %v2055 = vld [vmem:[%s10 + $0x1c] sm:$0xf]
    %v2056 = vld [vmem:[%s10 + $0x20] sm:$0xf]
    %v2057 = vld [vmem:[%s10 + $0x24] sm:$0xf]
    %v2058 = vld [vmem:[%s10 + $0x28] sm:$0xf]
    %v2059 = vld [vmem:[%s10 + $0x2c] sm:$0xf]
    %v2060 = vld [vmem:[%s10 + $0x30] sm:$0xf]
    %v2061 = vld [vmem:[%s10 + $0x34] sm:$0xf]
    %v2062 = vld [vmem:[%s10 + $0x38] sm:$0xf]
    %v2063 = vld [vmem:[%s10 + $0x3c] sm:$0xf]
    %v2080 = vunpack.c.l.b16 %v2048
    %v2081 = vunpack.c.l.b16 %v2049
    %v2082 = vunpack.c.l.b16 %v2050
    %v2083 = vunpack.c.l.b16 %v2051
    %v2084 = vunpack.c.l.b16 %v2052
    %v2085 = vunpack.c.l.b16 %v2053
    %v2086 = vunpack.c.l.b16 %v2054
    %v2087 = vunpack.c.l.b16 %v2055
    %v2088 = vunpack.c.l.b16 %v2056
    %v2089 = vunpack.c.l.b16 %v2057
    %v2090 = vunpack.c.l.b16 %v2058
    %v2091 = vunpack.c.l.b16 %v2059
    %v2092 = vunpack.c.l.b16 %v2060
    %v2093 = vunpack.c.l.b16 %v2061
    %v2094 = vunpack.c.l.b16 %v2062
    %v2095 = vunpack.c.l.b16 %v2063
    %v2096 = vpack.c.b16 %v2081, %v2080
    %v2097 = vpack.c.b16 %v2083, %v2082
    %v2098 = vpack.c.b16 %v2085, %v2084
    %v2099 = vpack.c.b16 %v2087, %v2086
    %v2100 = vpack.c.b16 %v2089, %v2088
    %v2101 = vpack.c.b16 %v2091, %v2090
    %v2102 = vpack.c.b16 %v2093, %v2092
    %v2103 = vpack.c.b16 %v2095, %v2094
    %2112 = vmatprep.subr.bf16.mxu0 0
    %2113 = vmatpush1.bf16.msra.mxu0 %v2103
    %2114 = vmatprep.subr.bf16.mxu0 0
    %2115 = vmatpush1.bf16.msra.mxu0 %v2102
    %2116 = vmatprep.subr.bf16.mxu0 0
    %2117 = vmatpush1.bf16.msra.mxu0 %v2101
    %2118 = vmatprep.subr.bf16.mxu0 0
    %2119 = vmatpush1.bf16.msra.mxu0 %v2100
    %2120 = vmatprep.subr.bf16.mxu0 0
    %2121 = vmatpush1.bf16.msra.mxu0 %v2099
    %2122 = vmatprep.subr.bf16.mxu0 0
    %2123 = vmatpush1.bf16.msra.mxu0 %v2098
    %2124 = vmatprep.subr.bf16.mxu0 0
    %2125 = vmatpush1.bf16.msra.mxu0 %v2097
    %2126 = vmatprep.subr.bf16.mxu0 0
    %2127 = vmatpush1.bf16.msra.mxu0 %v2096
    %2128 = vmatprep.subr.bf16.mxu0 0
    %2129 = vmatpush2.bf16.msra.mxu0 0
    %2130 = vmatprep.subr.bf16.mxu0 0
    %2131 = vmatpush2.bf16.msra.mxu0 0
    %2132 = vmatprep.subr.bf16.mxu0 0
    %2133 = vmatpush2.bf16.msra.mxu0 0
    %2134 = vmatprep.subr.bf16.mxu0 0
    %2135 = vmatpush2.bf16.msra.mxu0 0
    %2136 = vmatprep.subr.bf16.mxu0 0
    %2137 = vmatpush2.bf16.msra.mxu0 0
    %2138 = vmatprep.subr.bf16.mxu0 0
    %2139 = vmatpush2.bf16.msra.mxu0 0
    %2140 = vmatprep.subr.bf16.mxu0 0
    %2141 = vmatpush2.bf16.msra.mxu0 0
    %2142 = vmatprep.subr.bf16.mxu0 0
    %2143 = vmatpush2.bf16.msra.mxu0 0
    %2144 = vmatprep.mubr.bf16.mxu0 0
    %2145 = vmatmul.mubr.bf16.gmra.mxu0 %v2047
    %v2146 = vpop.f32.mrf.mxu0
    %v2147 = vadd.f32 0.0, %v2146
    %v2148 = vpop.f32.mrf.mxu0
    %v2149 = vpop.f32.mrf.mxu0
    %v2150 = vadd.f32 0.0, %v2149
    %v2151 = vpop.f32.mrf.mxu0
    %2152 = vdwg.mxu0
    %v2153 = vadd.f32 %v1909, %v2147
    %v2154 = vadd.f32 %v1910, %v2150
    %2155 = vst.msk [vmem:[#allocation2] sm:$0xff] %vm44, %v2153
    %2156 = vst.msk [vmem:[#allocation2 + $0x8] sm:$0xff] %vm44, %v2154
    // Predicated region
    $region46: #{phi3_decoder_layer.1} parent=1 // pred_check
      _
    $region47: #{phi3_decoder_layer.1} parent=1 // pred_check_branch
      %2158 = sbr.rel (0) target = $region49
    $region48: #{phi3_decoder_layer.1} parent=1 // pred_region
      %s2160 = ssub.s32 256, 256
      %2161 = vsyncadd [#allocation3], %s2160
      %s2162 = sshll.u32 [#allocation2], 4
      %s2163 = int_to_ptr.vmem [resolvable:$true] %s2162
      %2168 = dma.vmem_to_hbm [thread:$0]  %s2163, 256, %s11, [#allocation3], 128, 128, 8
    $region49: #{phi3_decoder_layer.1} parent=1 // pred_fallthru
      _
    // Predicated region
    $region50: #{phi3_decoder_layer.1} parent=1 // pred_check
      _
    $region51: #{phi3_decoder_layer.1} parent=1 // pred_check_branch
      %2170 = sbr.rel (0) target = $region53
    $region52: #{phi3_decoder_layer.1} parent=1 // pred_region
      %2171 = dma.done [#allocation3], 256
    $region53: #{phi3_decoder_layer.1} parent=1 // pred_fallthru
      _
    %2172 = vsyncpa [#allocation3], 1

</llo_original>
